<compile_context>
chip_gen: v5e
topology: v5e:2x2
jax: 0.10.0
libtpu: 0.0.40
codegen_flags: <defaults>
</compile_context>

<pallas_src>
import functools

import jax
import jax.numpy as jnp
from jax.experimental import pallas as pl
from jax.experimental.pallas import tpu as pltpu


def ffn_head_kernel(*refs, layer_nums, norm):
    """Fused FFN head computed on a VMEM-resident activation tile.

    refs (norm != None): x_ref, w_ref, b_ref, g_ref, beta_ref, o_ref
    refs (norm == None): x_ref, w_ref, b_ref, o_ref

      x_ref    : (TB, D)            bf16 activation tile
      w_ref    : (L, D, D)          bf16 weights, pre-transposed to (in, out)
      b_ref    : (L, 1, D)          f32 biases
      g_ref    : (max(L-1,1), 1, D) f32 norm gamma
      beta_ref : (max(L-1,1), 1, D) f32 norm beta
      o_ref    : (TB, D)            f32 output tile
    """
    if norm is None:
        x_ref, w_ref, b_ref, o_ref = refs
        g_ref = beta_ref = None
    else:
        x_ref, w_ref, b_ref, g_ref, beta_ref, o_ref = refs

    x = x_ref[...]                                    # bf16
    y = None
    for i in range(layer_nums):                       # static unroll (small L)
        # MXU: bf16 x bf16 inputs, f32 accumulation.
        y = jnp.dot(x, w_ref[i], preferred_element_type=jnp.float32) + b_ref[i]
        if i + 1 < layer_nums:
            if norm == "layernorm":
                # nn.LayerNorm(embed_dim, eps=1e-12): normalize over last dim.
                mean = jnp.mean(y, axis=-1, keepdims=True)
                c = y - mean                          # reuse centered tensor
                var = jnp.mean(c * c, axis=-1, keepdims=True)
                y = c * jax.lax.rsqrt(var + 1e-12) * g_ref[i] + beta_ref[i]
            elif norm == "batchnorm":
                # nn.BatchNorm1d(embed_dim), training-mode forward: batch
                # statistics (biased variance), eps=1e-5.  Wrapper guarantees
                # the whole batch lives in a single tile for this mode.
                mean = jnp.mean(y, axis=0, keepdims=True)
                c = y - mean
                var = jnp.mean(c * c, axis=0, keepdims=True)
                y = c * jax.lax.rsqrt(var + 1e-5) * g_ref[i] + beta_ref[i]
            y = jnp.maximum(y, 0.0)                   # ReLU (f32)
            x = y.astype(jnp.bfloat16)                # bf16 back into the MXU
    o_ref[...] = y.astype(o_ref.dtype)


def _pick_block_b(B):
    """Batch-tile rows: multiple of 16 (bf16 sublane packing), grid >= 2 when
    the batch allows (DMA/compute overlap + megacore), capped at 256 rows."""
    ntiles = max(1, pl.cdiv(B, 256))
    if ntiles == 1 and B > 16:
        ntiles = 2
    return max(16, pl.cdiv(pl.cdiv(B, ntiles), 16) * 16)


def ffn_head_forward(x, params, *, layer_nums, norm=None, block_b=None,
                     out_dtype=jnp.float32):
    """Runs the fused FFN-head kernel, tiling over the batch dimension."""
    B, D = x.shape
    w_t, b, g, beta = params
    L = layer_nums

    # bf16 into the MXU; f32 accumulation stays inside the kernel.
    x_in = x.astype(jnp.bfloat16)
    w_in = w_t.astype(jnp.bfloat16)

    if norm == "batchnorm":
        # Batch statistics need the whole batch in one tile.
        # TODO(synk): a two-pass kernel (per-feature sum/sumsq over batch
        # tiles, then normalize) would restore batch tiling / megacore here.
        block_b = B
    elif block_b is None:
        block_b = _pick_block_b(B)

    pad = (-B) % block_b
    if pad:
        # Zero-pad so the batch tiles evenly; padded rows are dropped below.
        # (All remaining ops are per-row; batchnorm never pads since block_b=B.)
        x_in = jnp.pad(x_in, ((0, pad), (0, 0)))
    Bp = B + pad
    grid = (Bp // block_b,)

    args = [x_in, w_in, b]
    if norm is not None:
        args += [g, beta]
    n_inv = len(args) - 1                    # grid-invariant operands

    # Explicit scoped-VMEM budget (defaults: 16 MiB v5e / 32 MiB v6e, v7x).
    # Cap at 64 MiB so the request never exceeds v7x physical VMEM per TC.
    resident_bytes = sum(int(a.size) * a.dtype.itemsize for a in args[1:])
    tile_bytes = block_b * D * (2 + 4)       # bf16 in-tile + f32 out-tile
    live_f32 = 6 * block_b * D * 4           # rough bound on f32 intermediates
    est = resident_bytes + 2 * tile_bytes + live_f32   # 2x: double-buffered tiles
    vmem_limit = int(min(64 << 20, max(32 << 20, 2 * est)))

    kernel = functools.partial(ffn_head_kernel, layer_nums=L, norm=norm)

    def build(invariant_specs):
        in_specs = [pl.BlockSpec((block_b, D), lambda i: (i, 0))] + invariant_specs
        return pl.pallas_call(
            kernel,
            out_shape=jax.ShapeDtypeStruct((Bp, D), out_dtype),
            grid=grid,
            in_specs=in_specs,
            out_specs=pl.BlockSpec((block_b, D), lambda i: (i, 0)),
            compiler_params=pltpu.CompilerParams(
                dimension_semantics=("parallel",),
                vmem_limit_bytes=vmem_limit,
            ),
        )

    # Preferred: whole-array VMEM residency for the grid-invariant operands
    # (single-buffered, DMA'd once).  Fall back to blocked specs with constant
    # index maps (double-buffered but universally supported) if rejected.
    try:
        resident = [pl.BlockSpec(memory_space=pltpu.MemorySpace.VMEM)
                    for _ in range(n_inv)]
        out = build(resident)(*args)
    except Exception:
        blocked = [pl.BlockSpec(a.shape, lambda i, n=a.ndim: (0,) * n)
                   for a in args[1:]]
        out = build(blocked)(*args)

    return out[:B] if pad else out


def init_ffn_head_params(key, embed_dim, layer_nums):
    """nn.Linear default init (U(-1/sqrt(fan_in), +)); f32 master params."""
    D, L = embed_dim, layer_nums
    k = 1.0 / jnp.sqrt(jnp.float32(D))
    keys = jax.random.split(key, 2 * L)
    # PyTorch stores W as (out, in); pre-transpose to (in, out) for x @ W_t.
    w_t = jnp.stack([
        jax.random.uniform(keys[2 * i], (D, D), jnp.float32, -k, k).T
        for i in range(L)
    ])                                                       # (L, D, D)
    b = jnp.stack([
        jax.random.uniform(keys[2 * i + 1], (1, D), jnp.float32, -k, k)
        for i in range(L)
    ])                                                       # (L, 1, D)
    n_norm = max(L - 1, 1)
    gamma = jnp.ones((n_norm, 1, D), jnp.float32)            # norm weight = 1
    beta = jnp.zeros((n_norm, 1, D), jnp.float32)            # norm bias = 0
    return w_t, b, gamma, beta


def ffn_head_reference(x, params, *, layer_nums, norm=None):
    """Pure-JAX reference using the same dtype policy as the kernel."""
    w_t, b, g, beta = params
    xb = x.astype(jnp.bfloat16)
    y = None
    for i in range(layer_nums):
        y = jnp.dot(xb, w_t[i].astype(jnp.bfloat16),
                    preferred_element_type=jnp.float32) + b[i]
        if i + 1 < layer_nums:
            if norm == "layernorm":
                mean = jnp.mean(y, axis=-1, keepdims=True)
                c = y - mean
                var = jnp.mean(c * c, axis=-1, keepdims=True)
                y = c * jax.lax.rsqrt(var + 1e-12) * g[i] + beta[i]
            elif norm == "batchnorm":
                mean = jnp.mean(y, axis=0, keepdims=True)
                c = y - mean
                var = jnp.mean(c * c, axis=0, keepdims=True)
                y = c * jax.lax.rsqrt(var + 1e-5) * g[i] + beta[i]
            y = jnp.maximum(y, 0.0)
            xb = y.astype(jnp.bfloat16)
    return y


if __name__ == "__main__":
    embed_dim = 128       # lane-dense last dim (multiple of 128)
    layer_nums = 3
    batch = 64            # tiled into 32-row blocks -> grid (2,)

    key = jax.random.PRNGKey(0)
    k_x, k_p = jax.random.split(key)
    x = jax.random.normal(k_x, (batch, embed_dim), jnp.float32)
    params = init_ffn_head_params(k_p, embed_dim, layer_nums)

    for norm in ("layernorm", "batchnorm", None):
        out = ffn_head_forward(x, params, layer_nums=layer_nums, norm=norm)
        out = jax.block_until_ready(out)
        ref = ffn_head_reference(x, params, layer_nums=layer_nums, norm=norm)
        assert out.shape == (batch, embed_dim)
        assert jnp.allclose(out, ref, atol=2e-3, rtol=2e-3), f"mismatch ({norm})"

    print("KERNEL_OK")
</pallas_src>

<mosaic_0001>
module attributes {stable_mosaic.version = 11 : i64} {
  func.func @ffn_head_kernel(%arg0: i32, %arg1: memref<32x128xbf16, #tpu.memory_space<vmem>>, %arg2: memref<3x128x128xbf16, #tpu.memory_space<vmem>>, %arg3: memref<3x1x128xf32, #tpu.memory_space<vmem>>, %arg4: memref<2x1x128xf32, #tpu.memory_space<vmem>>, %arg5: memref<2x1x128xf32, #tpu.memory_space<vmem>>, %arg6: memref<32x128xf32, #tpu.memory_space<vmem>>) attributes {dimension_semantics = [#tpu.dimension_semantics<parallel>], iteration_bounds = array<i64: 2>, scalar_prefetch = 0 : i64, scratch_operands = 0 : i64, tpu.core_type = #tpu.core_type<tc>, window_params = [{transform_indices = @transform_0, window_bounds = array<i64: 32, 128>}, {pipeline_mode = #tpu.pipeline_mode<synchronous>, transform_indices = @transform_1, window_bounds = array<i64: 3, 128, 128>}, {pipeline_mode = #tpu.pipeline_mode<synchronous>, transform_indices = @transform_2, window_bounds = array<i64: 3, 1, 128>}, {pipeline_mode = #tpu.pipeline_mode<synchronous>, transform_indices = @transform_3, window_bounds = array<i64: 2, 1, 128>}, {pipeline_mode = #tpu.pipeline_mode<synchronous>, transform_indices = @transform_4, window_bounds = array<i64: 2, 1, 128>}, {transform_indices = @transform_5, window_bounds = array<i64: 32, 128>}]} {
    %c0 = arith.constant 0 : index
    %c0_0 = arith.constant 0 : index
    %0 = vector.load %arg1[%c0, %c0_0] : memref<32x128xbf16, #tpu.memory_space<vmem>>, vector<32x128xbf16>
    %c0_1 = arith.constant 0 : index
    %c0_2 = arith.constant 0 : index
    %c0_3 = arith.constant 0 : index
    %1 = vector.load %arg2[%c0_1, %c0_2, %c0_3] : memref<3x128x128xbf16, #tpu.memory_space<vmem>>, vector<1x128x128xbf16>
    %2 = vector.shape_cast %1 : vector<1x128x128xbf16> to vector<128x128xbf16>
    %cst = arith.constant dense<0.000000e+00> : vector<32x128xf32>
    %3 = tpu.matmul %0, %2, %cst {dimension_numbers = #tpu.dot_dimension_numbers<[1], [0], [0], [1], [0, 0, 1, 1], [], []>} : vector<32x128xbf16>, vector<128x128xbf16>, vector<32x128xf32> -> vector<32x128xf32>
    %c0_4 = arith.constant 0 : index
    %c0_5 = arith.constant 0 : index
    %c0_6 = arith.constant 0 : index
    %4 = vector.load %arg3[%c0_4, %c0_5, %c0_6] : memref<3x1x128xf32, #tpu.memory_space<vmem>>, vector<1x1x128xf32>
    %5 = vector.shape_cast %4 : vector<1x1x128xf32> to vector<1x128xf32>
    %6 = vector.broadcast %5 : vector<1x128xf32> to vector<32x128xf32>
    %7 = arith.addf %3, %6 : vector<32x128xf32>
    %cst_7 = arith.constant dense<0.000000e+00> : vector<32xf32>
    %8 = vector.multi_reduction <add>, %7, %cst_7 [1] : vector<32x128xf32> to vector<32xf32>
    %9 = vector.shape_cast %8 : vector<32xf32> to vector<32x1xf32>
    %cst_8 = arith.constant 1.280000e+02 : f32
    %10 = vector.broadcast %cst_8 : f32 to vector<32x1xf32>
    %11 = arith.divf %9, %10 : vector<32x1xf32>
    %12 = vector.broadcast %11 : vector<32x1xf32> to vector<32x128xf32>
    %13 = arith.subf %7, %12 : vector<32x128xf32>
    %14 = arith.mulf %13, %13 : vector<32x128xf32>
    %cst_9 = arith.constant dense<0.000000e+00> : vector<32xf32>
    %15 = vector.multi_reduction <add>, %14, %cst_9 [1] : vector<32x128xf32> to vector<32xf32>
    %16 = vector.shape_cast %15 : vector<32xf32> to vector<32x1xf32>
    %cst_10 = arith.constant 1.280000e+02 : f32
    %17 = vector.broadcast %cst_10 : f32 to vector<32x1xf32>
    %18 = arith.divf %16, %17 : vector<32x1xf32>
    %cst_11 = arith.constant 9.99999996E-13 : f32
    %19 = vector.broadcast %cst_11 : f32 to vector<32x1xf32>
    %20 = arith.addf %18, %19 : vector<32x1xf32>
    %21 = math.rsqrt %20 : vector<32x1xf32>
    %22 = vector.broadcast %21 : vector<32x1xf32> to vector<32x128xf32>
    %23 = arith.mulf %13, %22 : vector<32x128xf32>
    %c0_12 = arith.constant 0 : index
    %c0_13 = arith.constant 0 : index
    %c0_14 = arith.constant 0 : index
    %24 = vector.load %arg4[%c0_12, %c0_13, %c0_14] : memref<2x1x128xf32, #tpu.memory_space<vmem>>, vector<1x1x128xf32>
    %25 = vector.shape_cast %24 : vector<1x1x128xf32> to vector<1x128xf32>
    %26 = vector.broadcast %25 : vector<1x128xf32> to vector<32x128xf32>
    %27 = arith.mulf %23, %26 : vector<32x128xf32>
    %c0_15 = arith.constant 0 : index
    %c0_16 = arith.constant 0 : index
    %c0_17 = arith.constant 0 : index
    %28 = vector.load %arg5[%c0_15, %c0_16, %c0_17] : memref<2x1x128xf32, #tpu.memory_space<vmem>>, vector<1x1x128xf32>
    %29 = vector.shape_cast %28 : vector<1x1x128xf32> to vector<1x128xf32>
    %30 = vector.broadcast %29 : vector<1x128xf32> to vector<32x128xf32>
    %31 = arith.addf %27, %30 : vector<32x128xf32>
    %cst_18 = arith.constant 0.000000e+00 : f32
    %32 = vector.broadcast %cst_18 : f32 to vector<32x128xf32>
    %33 = arith.maximumf %31, %32 : vector<32x128xf32>
    %34 = arith.truncf %33 : vector<32x128xf32> to vector<32x128xbf16>
    %c1 = arith.constant 1 : index
    %c0_19 = arith.constant 0 : index
    %c0_20 = arith.constant 0 : index
    %35 = vector.load %arg2[%c1, %c0_19, %c0_20] : memref<3x128x128xbf16, #tpu.memory_space<vmem>>, vector<1x128x128xbf16>
    %36 = vector.shape_cast %35 : vector<1x128x128xbf16> to vector<128x128xbf16>
    %cst_21 = arith.constant dense<0.000000e+00> : vector<32x128xf32>
    %37 = tpu.matmul %34, %36, %cst_21 {dimension_numbers = #tpu.dot_dimension_numbers<[1], [0], [0], [1], [0, 0, 1, 1], [], []>} : vector<32x128xbf16>, vector<128x128xbf16>, vector<32x128xf32> -> vector<32x128xf32>
    %c1_22 = arith.constant 1 : index
    %c0_23 = arith.constant 0 : index
    %c0_24 = arith.constant 0 : index
    %38 = vector.load %arg3[%c1_22, %c0_23, %c0_24] : memref<3x1x128xf32, #tpu.memory_space<vmem>>, vector<1x1x128xf32>
    %39 = vector.shape_cast %38 : vector<1x1x128xf32> to vector<1x128xf32>
    %40 = vector.broadcast %39 : vector<1x128xf32> to vector<32x128xf32>
    %41 = arith.addf %37, %40 : vector<32x128xf32>
    %cst_25 = arith.constant dense<0.000000e+00> : vector<32xf32>
    %42 = vector.multi_reduction <add>, %41, %cst_25 [1] : vector<32x128xf32> to vector<32xf32>
    %43 = vector.shape_cast %42 : vector<32xf32> to vector<32x1xf32>
    %cst_26 = arith.constant 1.280000e+02 : f32
    %44 = vector.broadcast %cst_26 : f32 to vector<32x1xf32>
    %45 = arith.divf %43, %44 : vector<32x1xf32>
    %46 = vector.broadcast %45 : vector<32x1xf32> to vector<32x128xf32>
    %47 = arith.subf %41, %46 : vector<32x128xf32>
    %48 = arith.mulf %47, %47 : vector<32x128xf32>
    %cst_27 = arith.constant dense<0.000000e+00> : vector<32xf32>
    %49 = vector.multi_reduction <add>, %48, %cst_27 [1] : vector<32x128xf32> to vector<32xf32>
    %50 = vector.shape_cast %49 : vector<32xf32> to vector<32x1xf32>
    %cst_28 = arith.constant 1.280000e+02 : f32
    %51 = vector.broadcast %cst_28 : f32 to vector<32x1xf32>
    %52 = arith.divf %50, %51 : vector<32x1xf32>
    %cst_29 = arith.constant 9.99999996E-13 : f32
    %53 = vector.broadcast %cst_29 : f32 to vector<32x1xf32>
    %54 = arith.addf %52, %53 : vector<32x1xf32>
    %55 = math.rsqrt %54 : vector<32x1xf32>
    %56 = vector.broadcast %55 : vector<32x1xf32> to vector<32x128xf32>
    %57 = arith.mulf %47, %56 : vector<32x128xf32>
    %c1_30 = arith.constant 1 : index
    %c0_31 = arith.constant 0 : index
    %c0_32 = arith.constant 0 : index
    %58 = vector.load %arg4[%c1_30, %c0_31, %c0_32] : memref<2x1x128xf32, #tpu.memory_space<vmem>>, vector<1x1x128xf32>
    %59 = vector.shape_cast %58 : vector<1x1x128xf32> to vector<1x128xf32>
    %60 = vector.broadcast %59 : vector<1x128xf32> to vector<32x128xf32>
    %61 = arith.mulf %57, %60 : vector<32x128xf32>
    %c1_33 = arith.constant 1 : index
    %c0_34 = arith.constant 0 : index
    %c0_35 = arith.constant 0 : index
    %62 = vector.load %arg5[%c1_33, %c0_34, %c0_35] : memref<2x1x128xf32, #tpu.memory_space<vmem>>, vector<1x1x128xf32>
    %63 = vector.shape_cast %62 : vector<1x1x128xf32> to vector<1x128xf32>
    %64 = vector.broadcast %63 : vector<1x128xf32> to vector<32x128xf32>
    %65 = arith.addf %61, %64 : vector<32x128xf32>
    %cst_36 = arith.constant 0.000000e+00 : f32
    %66 = vector.broadcast %cst_36 : f32 to vector<32x128xf32>
    %67 = arith.maximumf %65, %66 : vector<32x128xf32>
    %68 = arith.truncf %67 : vector<32x128xf32> to vector<32x128xbf16>
    %c2 = arith.constant 2 : index
    %c0_37 = arith.constant 0 : index
    %c0_38 = arith.constant 0 : index
    %69 = vector.load %arg2[%c2, %c0_37, %c0_38] : memref<3x128x128xbf16, #tpu.memory_space<vmem>>, vector<1x128x128xbf16>
    %70 = vector.shape_cast %69 : vector<1x128x128xbf16> to vector<128x128xbf16>
    %cst_39 = arith.constant dense<0.000000e+00> : vector<32x128xf32>
    %71 = tpu.matmul %68, %70, %cst_39 {dimension_numbers = #tpu.dot_dimension_numbers<[1], [0], [0], [1], [0, 0, 1, 1], [], []>} : vector<32x128xbf16>, vector<128x128xbf16>, vector<32x128xf32> -> vector<32x128xf32>
    %c2_40 = arith.constant 2 : index
    %c0_41 = arith.constant 0 : index
    %c0_42 = arith.constant 0 : index
    %72 = vector.load %arg3[%c2_40, %c0_41, %c0_42] : memref<3x1x128xf32, #tpu.memory_space<vmem>>, vector<1x1x128xf32>
    %73 = vector.shape_cast %72 : vector<1x1x128xf32> to vector<1x128xf32>
    %74 = vector.broadcast %73 : vector<1x128xf32> to vector<32x128xf32>
    %75 = arith.addf %71, %74 : vector<32x128xf32>
    %c0_43 = arith.constant 0 : index
    %c0_44 = arith.constant 0 : index
    %76 = vector.load %arg6[%c0_43, %c0_44] : memref<32x128xf32, #tpu.memory_space<vmem>>, vector<32x128xf32>
    tpu.vector_store %arg6[%c0_43, %c0_44], %75 {strides = array<i32>} : memref<32x128xf32, #tpu.memory_space<vmem>>, vector<32x128xf32>,
    return
  }
  func.func @transform_0(%arg0: i32) -> (i32, i32) {
    %c0_i32 = arith.constant 0 : i32
    %c0_i32_0 = arith.constant 0 : i32
    return %arg0, %c0_i32 : i32, i32
  }
  func.func @transform_1(%arg0: i32) -> (i32, i32, i32) {
    %c0_i32 = arith.constant 0 : i32
    %c0_i32_0 = arith.constant 0 : i32
    %c0_i32_1 = arith.constant 0 : i32
    %c0_i32_2 = arith.constant 0 : i32
    return %c0_i32, %c0_i32_0, %c0_i32_1 : i32, i32, i32
  }
  func.func @transform_2(%arg0: i32) -> (i32, i32, i32) {
    %c0_i32 = arith.constant 0 : i32
    %c0_i32_0 = arith.constant 0 : i32
    %c0_i32_1 = arith.constant 0 : i32
    %c0_i32_2 = arith.constant 0 : i32
    return %c0_i32, %c0_i32_0, %c0_i32_1 : i32, i32, i32
  }
  func.func @transform_3(%arg0: i32) -> (i32, i32, i32) {
    %c0_i32 = arith.constant 0 : i32
    %c0_i32_0 = arith.constant 0 : i32
    %c0_i32_1 = arith.constant 0 : i32
    %c0_i32_2 = arith.constant 0 : i32
    return %c0_i32, %c0_i32_0, %c0_i32_1 : i32, i32, i32
  }
  func.func @transform_4(%arg0: i32) -> (i32, i32, i32) {
    %c0_i32 = arith.constant 0 : i32
    %c0_i32_0 = arith.constant 0 : i32
    %c0_i32_1 = arith.constant 0 : i32
    %c0_i32_2 = arith.constant 0 : i32
    return %c0_i32, %c0_i32_0, %c0_i32_1 : i32, i32, i32
  }
  func.func @transform_5(%arg0: i32) -> (i32, i32) {
    %c0_i32 = arith.constant 0 : i32
    %c0_i32_0 = arith.constant 0 : i32
    return %arg0, %c0_i32 : i32, i32
  }
}

module attributes {stable_mosaic.version = 11 : i64} {
  func.func @ffn_head_kernel(%arg0: i32, %arg1: memref<32x128xbf16, #tpu.memory_space<vmem>>, %arg2: memref<3x128x128xbf16, #tpu.memory_space<vmem>>, %arg3: memref<3x1x128xf32, #tpu.memory_space<vmem>>, %arg4: memref<2x1x128xf32, #tpu.memory_space<vmem>>, %arg5: memref<2x1x128xf32, #tpu.memory_space<vmem>>, %arg6: memref<32x128xf32, #tpu.memory_space<vmem>>) attributes {dimension_semantics = [#tpu.dimension_semantics<parallel>], iteration_bounds = array<i64: 2>, scalar_prefetch = 0 : i64, scratch_operands = 0 : i64, tpu.core_type = #tpu.core_type<tc>, window_params = [{transform_indices = @transform_0, window_bounds = array<i64: 32, 128>}, {pipeline_mode = #tpu.pipeline_mode<synchronous>, transform_indices = @transform_1, window_bounds = array<i64: 3, 128, 128>}, {pipeline_mode = #tpu.pipeline_mode<synchronous>, transform_indices = @transform_2, window_bounds = array<i64: 3, 1, 128>}, {pipeline_mode = #tpu.pipeline_mode<synchronous>, transform_indices = @transform_3, window_bounds = array<i64: 2, 1, 128>}, {pipeline_mode = #tpu.pipeline_mode<synchronous>, transform_indices = @transform_4, window_bounds = array<i64: 2, 1, 128>}, {transform_indices = @transform_5, window_bounds = array<i64: 32, 128>}]} {
    %c0 = arith.constant 0 : index
    %c0_0 = arith.constant 0 : index
    %0 = vector.load %arg1[%c0, %c0_0] : memref<32x128xbf16, #tpu.memory_space<vmem>>, vector<32x128xbf16>
    %c0_1 = arith.constant 0 : index
    %c0_2 = arith.constant 0 : index
    %c0_3 = arith.constant 0 : index
    %1 = vector.load %arg2[%c0_1, %c0_2, %c0_3] : memref<3x128x128xbf16, #tpu.memory_space<vmem>>, vector<1x128x128xbf16>
    %2 = vector.shape_cast %1 : vector<1x128x128xbf16> to vector<128x128xbf16>
    %cst = arith.constant dense<0.000000e+00> : vector<32x128xf32>
    %3 = tpu.matmul %0, %2, %cst {dimension_numbers = #tpu.dot_dimension_numbers<[1], [0], [0], [1], [0, 0, 1, 1], [], []>} : vector<32x128xbf16>, vector<128x128xbf16>, vector<32x128xf32> -> vector<32x128xf32>
    %c0_4 = arith.constant 0 : index
    %c0_5 = arith.constant 0 : index
    %c0_6 = arith.constant 0 : index
    %4 = vector.load %arg3[%c0_4, %c0_5, %c0_6] : memref<3x1x128xf32, #tpu.memory_space<vmem>>, vector<1x1x128xf32>
    %5 = vector.shape_cast %4 : vector<1x1x128xf32> to vector<1x128xf32>
    %6 = vector.broadcast %5 : vector<1x128xf32> to vector<32x128xf32>
    %7 = arith.addf %3, %6 : vector<32x128xf32>
    %cst_7 = arith.constant dense<0.000000e+00> : vector<32xf32>
    %8 = vector.multi_reduction <add>, %7, %cst_7 [1] : vector<32x128xf32> to vector<32xf32>
    %9 = vector.shape_cast %8 : vector<32xf32> to vector<32x1xf32>
    %cst_8 = arith.constant 1.280000e+02 : f32
    %10 = vector.broadcast %cst_8 : f32 to vector<32x1xf32>
    %11 = arith.divf %9, %10 : vector<32x1xf32>
    %12 = vector.broadcast %11 : vector<32x1xf32> to vector<32x128xf32>
    %13 = arith.subf %7, %12 : vector<32x128xf32>
    %14 = arith.mulf %13, %13 : vector<32x128xf32>
    %cst_9 = arith.constant dense<0.000000e+00> : vector<32xf32>
    %15 = vector.multi_reduction <add>, %14, %cst_9 [1] : vector<32x128xf32> to vector<32xf32>
    %16 = vector.shape_cast %15 : vector<32xf32> to vector<32x1xf32>
    %cst_10 = arith.constant 1.280000e+02 : f32
    %17 = vector.broadcast %cst_10 : f32 to vector<32x1xf32>
    %18 = arith.divf %16, %17 : vector<32x1xf32>
    %cst_11 = arith.constant 9.99999996E-13 : f32
    %19 = vector.broadcast %cst_11 : f32 to vector<32x1xf32>
    %20 = arith.addf %18, %19 : vector<32x1xf32>
    %21 = math.rsqrt %20 : vector<32x1xf32>
    %22 = vector.broadcast %21 : vector<32x1xf32> to vector<32x128xf32>
    %23 = arith.mulf %13, %22 : vector<32x128xf32>
    %c0_12 = arith.constant 0 : index
    %c0_13 = arith.constant 0 : index
    %c0_14 = arith.constant 0 : index
    %24 = vector.load %arg4[%c0_12, %c0_13, %c0_14] : memref<2x1x128xf32, #tpu.memory_space<vmem>>, vector<1x1x128xf32>
    %25 = vector.shape_cast %24 : vector<1x1x128xf32> to vector<1x128xf32>
    %26 = vector.broadcast %25 : vector<1x128xf32> to vector<32x128xf32>
    %27 = arith.mulf %23, %26 : vector<32x128xf32>
    %c0_15 = arith.constant 0 : index
    %c0_16 = arith.constant 0 : index
    %c0_17 = arith.constant 0 : index
    %28 = vector.load %arg5[%c0_15, %c0_16, %c0_17] : memref<2x1x128xf32, #tpu.memory_space<vmem>>, vector<1x1x128xf32>
    %29 = vector.shape_cast %28 : vector<1x1x128xf32> to vector<1x128xf32>
    %30 = vector.broadcast %29 : vector<1x128xf32> to vector<32x128xf32>
    %31 = arith.addf %27, %30 : vector<32x128xf32>
    %cst_18 = arith.constant 0.000000e+00 : f32
    %32 = vector.broadcast %cst_18 : f32 to vector<32x128xf32>
    %33 = arith.maximumf %31, %32 : vector<32x128xf32>
    %34 = arith.truncf %33 : vector<32x128xf32> to vector<32x128xbf16>
    %c1 = arith.constant 1 : index
    %c0_19 = arith.constant 0 : index
    %c0_20 = arith.constant 0 : index
    %35 = vector.load %arg2[%c1, %c0_19, %c0_20] : memref<3x128x128xbf16, #tpu.memory_space<vmem>>, vector<1x128x128xbf16>
    %36 = vector.shape_cast %35 : vector<1x128x128xbf16> to vector<128x128xbf16>
    %cst_21 = arith.constant dense<0.000000e+00> : vector<32x128xf32>
    %37 = tpu.matmul %34, %36, %cst_21 {dimension_numbers = #tpu.dot_dimension_numbers<[1], [0], [0], [1], [0, 0, 1, 1], [], []>} : vector<32x128xbf16>, vector<128x128xbf16>, vector<32x128xf32> -> vector<32x128xf32>
    %c1_22 = arith.constant 1 : index
    %c0_23 = arith.constant 0 : index
    %c0_24 = arith.constant 0 : index
    %38 = vector.load %arg3[%c1_22, %c0_23, %c0_24] : memref<3x1x128xf32, #tpu.memory_space<vmem>>, vector<1x1x128xf32>
    %39 = vector.shape_cast %38 : vector<1x1x128xf32> to vector<1x128xf32>
    %40 = vector.broadcast %39 : vector<1x128xf32> to vector<32x128xf32>
    %41 = arith.addf %37, %40 : vector<32x128xf32>
    %cst_25 = arith.constant dense<0.000000e+00> : vector<32xf32>
    %42 = vector.multi_reduction <add>, %41, %cst_25 [1] : vector<32x128xf32> to vector<32xf32>
    %43 = vector.shape_cast %42 : vector<32xf32> to vector<32x1xf32>
    %cst_26 = arith.constant 1.280000e+02 : f32
    %44 = vector.broadcast %cst_26 : f32 to vector<32x1xf32>
    %45 = arith.divf %43, %44 : vector<32x1xf32>
    %46 = vector.broadcast %45 : vector<32x1xf32> to vector<32x128xf32>
    %47 = arith.subf %41, %46 : vector<32x128xf32>
    %48 = arith.mulf %47, %47 : vector<32x128xf32>
    %cst_27 = arith.constant dense<0.000000e+00> : vector<32xf32>
    %49 = vector.multi_reduction <add>, %48, %cst_27 [1] : vector<32x128xf32> to vector<32xf32>
    %50 = vector.shape_cast %49 : vector<32xf32> to vector<32x1xf32>
    %cst_28 = arith.constant 1.280000e+02 : f32
    %51 = vector.broadcast %cst_28 : f32 to vector<32x1xf32>
    %52 = arith.divf %50, %51 : vector<32x1xf32>
    %cst_29 = arith.constant 9.99999996E-13 : f32
    %53 = vector.broadcast %cst_29 : f32 to vector<32x1xf32>
    %54 = arith.addf %52, %53 : vector<32x1xf32>
    %55 = math.rsqrt %54 : vector<32x1xf32>
    %56 = vector.broadcast %55 : vector<32x1xf32> to vector<32x128xf32>
    %57 = arith.mulf %47, %56 : vector<32x128xf32>
    %c1_30 = arith.constant 1 : index
    %c0_31 = arith.constant 0 : index
    %c0_32 = arith.constant 0 : index
    %58 = vector.load %arg4[%c1_30, %c0_31, %c0_32] : memref<2x1x128xf32, #tpu.memory_space<vmem>>, vector<1x1x128xf32>
    %59 = vector.shape_cast %58 : vector<1x1x128xf32> to vector<1x128xf32>
    %60 = vector.broadcast %59 : vector<1x128xf32> to vector<32x128xf32>
    %61 = arith.mulf %57, %60 : vector<32x128xf32>
    %c1_33 = arith.constant 1 : index
    %c0_34 = arith.constant 0 : index
    %c0_35 = arith.constant 0 : index
    %62 = vector.load %arg5[%c1_33, %c0_34, %c0_35] : memref<2x1x128xf32, #tpu.memory_space<vmem>>, vector<1x1x128xf32>
    %63 = vector.shape_cast %62 : vector<1x1x128xf32> to vector<1x128xf32>
    %64 = vector.broadcast %63 : vector<1x128xf32> to vector<32x128xf32>
    %65 = arith.addf %61, %64 : vector<32x128xf32>
    %cst_36 = arith.constant 0.000000e+00 : f32
    %66 = vector.broadcast %cst_36 : f32 to vector<32x128xf32>
    %67 = arith.maximumf %65, %66 : vector<32x128xf32>
    %68 = arith.truncf %67 : vector<32x128xf32> to vector<32x128xbf16>
    %c2 = arith.constant 2 : index
    %c0_37 = arith.constant 0 : index
    %c0_38 = arith.constant 0 : index
    %69 = vector.load %arg2[%c2, %c0_37, %c0_38] : memref<3x128x128xbf16, #tpu.memory_space<vmem>>, vector<1x128x128xbf16>
    %70 = vector.shape_cast %69 : vector<1x128x128xbf16> to vector<128x128xbf16>
    %cst_39 = arith.constant dense<0.000000e+00> : vector<32x128xf32>
    %71 = tpu.matmul %68, %70, %cst_39 {dimension_numbers = #tpu.dot_dimension_numbers<[1], [0], [0], [1], [0, 0, 1, 1], [], []>} : vector<32x128xbf16>, vector<128x128xbf16>, vector<32x128xf32> -> vector<32x128xf32>
    %c2_40 = arith.constant 2 : index
    %c0_41 = arith.constant 0 : index
    %c0_42 = arith.constant 0 : index
    %72 = vector.load %arg3[%c2_40, %c0_41, %c0_42] : memref<3x1x128xf32, #tpu.memory_space<vmem>>, vector<1x1x128xf32>
    %73 = vector.shape_cast %72 : vector<1x1x128xf32> to vector<1x128xf32>
    %74 = vector.broadcast %73 : vector<1x128xf32> to vector<32x128xf32>
    %75 = arith.addf %71, %74 : vector<32x128xf32>
    %c0_43 = arith.constant 0 : index
    %c0_44 = arith.constant 0 : index
    %76 = vector.load %arg6[%c0_43, %c0_44] : memref<32x128xf32, #tpu.memory_space<vmem>>, vector<32x128xf32>
    tpu.vector_store %arg6[%c0_43, %c0_44], %75 {strides = array<i32>} : memref<32x128xf32, #tpu.memory_space<vmem>>, vector<32x128xf32>,
    return
  }
  func.func @transform_0(%arg0: i32) -> (i32, i32) {
    %c0_i32 = arith.constant 0 : i32
    %c0_i32_0 = arith.constant 0 : i32
    return %arg0, %c0_i32 : i32, i32
  }
  func.func @transform_1(%arg0: i32) -> (i32, i32, i32) {
    %c0_i32 = arith.constant 0 : i32
    %c0_i32_0 = arith.constant 0 : i32
    %c0_i32_1 = arith.constant 0 : i32
    %c0_i32_2 = arith.constant 0 : i32
    return %c0_i32, %c0_i32_0, %c0_i32_1 : i32, i32, i32
  }
  func.func @transform_2(%arg0: i32) -> (i32, i32, i32) {
    %c0_i32 = arith.constant 0 : i32
    %c0_i32_0 = arith.constant 0 : i32
    %c0_i32_1 = arith.constant 0 : i32
    %c0_i32_2 = arith.constant 0 : i32
    return %c0_i32, %c0_i32_0, %c0_i32_1 : i32, i32, i32
  }
  func.func @transform_3(%arg0: i32) -> (i32, i32, i32) {
    %c0_i32 = arith.constant 0 : i32
    %c0_i32_0 = arith.constant 0 : i32
    %c0_i32_1 = arith.constant 0 : i32
    %c0_i32_2 = arith.constant 0 : i32
    return %c0_i32, %c0_i32_0, %c0_i32_1 : i32, i32, i32
  }
  func.func @transform_4(%arg0: i32) -> (i32, i32, i32) {
    %c0_i32 = arith.constant 0 : i32
    %c0_i32_0 = arith.constant 0 : i32
    %c0_i32_1 = arith.constant 0 : i32
    %c0_i32_2 = arith.constant 0 : i32
    return %c0_i32, %c0_i32_0, %c0_i32_1 : i32, i32, i32
  }
  func.func @transform_5(%arg0: i32) -> (i32, i32) {
    %c0_i32 = arith.constant 0 : i32
    %c0_i32_0 = arith.constant 0 : i32
    return %arg0, %c0_i32 : i32, i32
  }
}

</mosaic_0001>

<llo_original>
// kernel: tpu_custom_call.1
$region0: #{tpu_custom_call.1}
  #allocation0 [shape = 'u32[]', space=smem, size = 0x4, offset = 0x4, fixed_abs, tag = 'smem constant byte address 0x4 - core index']
  #allocation1 [shape = 'u32[72,128]{1,0:T(1,128)}', space=vmem, size = 0x9000, scoped, tag = 'internal scratch']
  %s0 = inlined_call_operand.hbm [shape: bf16[64,128], index: 0, kind: input, shape index: {}]
  %s1 = inlined_call_operand.hbm [shape: bf16[3,128,128], index: 1, kind: input, shape index: {}]
  %s2 = inlined_call_operand.hbm [shape: f32[3,1,128], index: 2, kind: input, shape index: {}]
  %s3 = inlined_call_operand.vmem [shape: f32[2,1,128], index: 3, kind: input, shape index: {}]
  %s4 = inlined_call_operand.hbm [shape: f32[2,1,128], index: 4, kind: input, shape index: {}]
  %s5 = inlined_call_operand.hbm [shape: f32[64,128], index: 5, kind: output, shape index: {}]
  %s6 = sld [smem:[#allocation0]]
  $region69: #{tpu_custom_call.1} parent=0
    _
  %s8 = ssub.s32 1, %s6
  %s9 = scalar_select 0, %s8, %s6
  $region1: #{tpu_custom_call.1} parent=0
    #allocation2 [shape = 'u8[16384]{0}', space=vmem, size = 0x4000, scoped, tag = 'input window, operand 0']
    #allocation3 [shape = 's32[2]{0}', space=sflag, size = 0x8, scoped, tag = 'scoped memory for tpu_custom_call.1']
    #allocation4 [shape = 's32[2]{0}', space=sflag, size = 0x8, scoped, tag = 'scoped memory for tpu_custom_call.1']
    #allocation5 [shape = 'u8[98304]{0}', space=vmem, size = 0x18000, scoped, tag = 'input window, operand 1, single buffered']
    #allocation6 [shape = 's32[1]{0}', space=sflag, size = 0x4, scoped, tag = 'scoped memory for tpu_custom_call.1']
    #allocation7 [shape = 'u8[1536]{0}', space=vmem, size = 0x800, scoped, tag = 'input window, operand 2, single buffered']
    #allocation8 [shape = 'u8[1024]{0}', space=vmem, size = 0x400, scoped, tag = 'input window, operand 4, single buffered']
    #allocation9 [shape = 's32[1]{0}', space=sflag, size = 0x4, scoped, tag = 'scoped memory for tpu_custom_call.1']
    #allocation10 [shape = 'u8[32768]{0}', space=vmem, size = 0x8000, scoped, tag = 'output window, operand 0']
    %10 = vsyncpa [#allocation3], 0
    %s11 = scalar_lea.sflag [#allocation3], 1
    %12 = vsyncpa %s11, 0
    %13 = vsyncpa [#allocation6], 0
    %14 = vsyncpa [#allocation9], 0
    %15 = vsyncpa [#allocation4], 0
    %s16 = scalar_lea.sflag [#allocation4], 1
    %17 = vsyncpa %s16, 0
    loop: start=0, step=1, limit=4
    $region2: #{tpu_custom_call.1} parent=1 // loop_pre_header
      _
    $region3: #{tpu_custom_call.1} parent=1 // loop_header
      %s19 = sphi 0, %s23
      %p20 = scmp.ge.s32.totalorder %s19, 4
      %s29 = sphi 0, %s31
      %s32 = sphi 0, %s29
      %s33 = sphi 0, %s32
      %s49 = sphi 0, %s33
      %s53 = sphi 0, %s53
      %s55 = sphi 0, %s53
      %s56 = sphi 0, %s55
      %s70 = sphi 0, %s56
      %s74 = sphi 0, %s74
      %s76 = sphi 0, %s74
      %s77 = sphi 0, %s76
      %s91 = sphi 0, %s77
      %s95 = sphi 0, %s95
      %s97 = sphi 0, %s95
      %s98 = sphi 0, %s97
      %s112 = sphi 0, %s98
      %s116 = sphi 0, %s116
      %s118 = sphi 0, %s116
      %s119 = sphi 0, %s118
      %s133 = sphi 0, %s119
      %s139 = sphi 0, %s141
      %s142 = sphi 0, %s139
      %s143 = sphi 0, %s142
      %s159 = sphi 0, %s143
    $region4: #{tpu_custom_call.1} parent=1 // loop_header_branch
      %22 = sbr.rel (%p20) target = $region8
    $region5: #{tpu_custom_call.1} parent=1 // loop_body
      %s24 = ssub.s32 %s19, 1
      %s25 = ssub.s32 %s19, 2
      %s26 = sadd.s32 %s19, 1
      %s27 = ssub.s32 %s19, %s26
      %p28 = scmp.eq.s32.totalorder %s27, 0
      %s30 = sadd.s32 %s29, 1
      %s31 = scalar_select %p28, %s29, %s30
      %p34 = pneg %p28
      %p35 = scmp.eq.s32.totalorder %s19, 1
      %p36 = por %p34, %p35
      %p37 = scmp.ne.s32.totalorder %s29, %s32
      %p38 = scmp.eq.s32.totalorder %s19, 0
      %p39 = por %p37, %p38
      %p40 = scmp.ne.s32.totalorder %s29, %s32
      %p41 = scmp.eq.s32.totalorder %s24, 1
      %p42 = por %p40, %p41
      %p43 = scmp.ne.s32.totalorder %s32, %s33
      %p44 = scmp.eq.s32.totalorder %s24, 0
      %p45 = por %p43, %p44
      %p46 = scmp.ne.s32.totalorder %s32, %s33
      %p47 = scmp.eq.s32.totalorder %s25, 1
      %p48 = por %p46, %p47
      %p50 = scmp.ne.s32.totalorder %s33, %s49
      %p51 = scmp.eq.s32.totalorder %s25, 0
      %p52 = por %p50, %p51
      %s54 = sadd.s32 %s53, 1
      %p57 = scmp.eq.s32.totalorder %s19, 1
      %p58 = scmp.ne.s32.totalorder %s53, %s55
      %p59 = scmp.eq.s32.totalorder %s19, 0
      %p60 = por %p58, %p59
      %p61 = scmp.ne.s32.totalorder %s53, %s55
      %p62 = scmp.eq.s32.totalorder %s24, 1
      %p63 = por %p61, %p62
      %p64 = scmp.ne.s32.totalorder %s55, %s56
      %p65 = scmp.eq.s32.totalorder %s24, 0
      %p66 = por %p64, %p65
      %p67 = scmp.ne.s32.totalorder %s55, %s56
      %p68 = scmp.eq.s32.totalorder %s25, 1
      %p69 = por %p67, %p68
      %p71 = scmp.ne.s32.totalorder %s56, %s70
      %p72 = scmp.eq.s32.totalorder %s25, 0
      %p73 = por %p71, %p72
      %s75 = sadd.s32 %s74, 1
      %p78 = scmp.eq.s32.totalorder %s19, 1
      %p79 = scmp.ne.s32.totalorder %s74, %s76
      %p80 = scmp.eq.s32.totalorder %s19, 0
      %p81 = por %p79, %p80
      %p82 = scmp.ne.s32.totalorder %s74, %s76
      %p83 = scmp.eq.s32.totalorder %s24, 1
      %p84 = por %p82, %p83
      %p85 = scmp.ne.s32.totalorder %s76, %s77
      %p86 = scmp.eq.s32.totalorder %s24, 0
      %p87 = por %p85, %p86
      %p88 = scmp.ne.s32.totalorder %s76, %s77
      %p89 = scmp.eq.s32.totalorder %s25, 1
      %p90 = por %p88, %p89
      %p92 = scmp.ne.s32.totalorder %s77, %s91
      %p93 = scmp.eq.s32.totalorder %s25, 0
      %p94 = por %p92, %p93
      %s96 = sadd.s32 %s95, 1
      %p99 = scmp.eq.s32.totalorder %s19, 1
      %p100 = scmp.ne.s32.totalorder %s95, %s97
      %p101 = scmp.eq.s32.totalorder %s19, 0
      %p102 = por %p100, %p101
      %p103 = scmp.ne.s32.totalorder %s95, %s97
      %p104 = scmp.eq.s32.totalorder %s24, 1
      %p105 = por %p103, %p104
      %p106 = scmp.ne.s32.totalorder %s97, %s98
      %p107 = scmp.eq.s32.totalorder %s24, 0
      %p108 = por %p106, %p107
      %p109 = scmp.ne.s32.totalorder %s97, %s98
      %p110 = scmp.eq.s32.totalorder %s25, 1
      %p111 = por %p109, %p110
      %p113 = scmp.ne.s32.totalorder %s98, %s112
      %p114 = scmp.eq.s32.totalorder %s25, 0
      %p115 = por %p113, %p114
      %s117 = sadd.s32 %s116, 1
      %p120 = scmp.eq.s32.totalorder %s19, 1
      %p121 = scmp.ne.s32.totalorder %s116, %s118
      %p122 = scmp.eq.s32.totalorder %s19, 0
      %p123 = por %p121, %p122
      %p124 = scmp.ne.s32.totalorder %s116, %s118
      %p125 = scmp.eq.s32.totalorder %s24, 1
      %p126 = por %p124, %p125
      %p127 = scmp.ne.s32.totalorder %s118, %s119
      %p128 = scmp.eq.s32.totalorder %s24, 0
      %p129 = por %p127, %p128
      %p130 = scmp.ne.s32.totalorder %s118, %s119
      %p131 = scmp.eq.s32.totalorder %s25, 1
      %p132 = por %p130, %p131
      %p134 = scmp.ne.s32.totalorder %s119, %s133
      %p135 = scmp.eq.s32.totalorder %s25, 0
      %p136 = por %p134, %p135
      %s137 = ssub.s32 %s19, %s26
      %p138 = scmp.eq.s32.totalorder %s137, 0
      %s140 = sadd.s32 %s139, 1
      %s141 = scalar_select %p138, %s139, %s140
      %p144 = pneg %p138
      %p145 = scmp.eq.s32.totalorder %s19, 1
      %p146 = por %p144, %p145
      %p147 = scmp.ne.s32.totalorder %s139, %s142
      %p148 = scmp.eq.s32.totalorder %s19, 0
      %p149 = por %p147, %p148
      %p150 = scmp.ne.s32.totalorder %s139, %s142
      %p151 = scmp.eq.s32.totalorder %s24, 1
      %p152 = por %p150, %p151
      %p153 = scmp.ne.s32.totalorder %s142, %s143
      %p154 = scmp.eq.s32.totalorder %s24, 0
      %p155 = por %p153, %p154
      %p156 = scmp.ne.s32.totalorder %s142, %s143
      %p157 = scmp.eq.s32.totalorder %s25, 1
      %p158 = por %p156, %p157
      %p160 = scmp.ne.s32.totalorder %s143, %s159
      %p161 = scmp.eq.s32.totalorder %s25, 0
      %p162 = por %p160, %p161
      %p163 = scmp.le.s32.totalorder 1, %s19
      %p164 = scmp.lt.s32.totalorder %s19, 3
      %p165 = pnand %p163, %p164
      %p166 = pneg %p165
      // Predicated region
      $region9: #{tpu_custom_call.1} parent=5 // pred_check
        _
      $region10: #{tpu_custom_call.1} parent=5 // pred_check_branch
        %168 = sbr.rel (%p165) target = $region12
      $region11: #{tpu_custom_call.1} parent=5 // pred_region
        %s169 = ssub.s32 %s19, 1
        // Predicated region
        $region13: #{tpu_custom_call.1} parent=11 // pred_check
          %p170 = pneg %p66
        $region14: #{tpu_custom_call.1} parent=11 // pred_check_branch
          %172 = sbr.rel (%p170) target = $region16
        $region15: #{tpu_custom_call.1} parent=11 // pred_region
          %174 = vsyncadd [#allocation6], 0
          %s175 = sshll.u32 %s1, 4
          %s176 = int_to_ptr.hbm [resolvable:$true] %s175
          %s177 = sshll.u32 [#allocation5], 4
          %s178 = int_to_ptr.vmem [resolvable:$true] %s177
          %183 = dma.hbm_to_vmem [thread:$0]  %s176, 3072, %s178, [#allocation6], 64, 64, 4
        $region16: #{tpu_custom_call.1} parent=11 // pred_fallthru
          _
        // Predicated region
        $region17: #{tpu_custom_call.1} parent=11 // pred_check
          %p184 = pneg %p87
        $region18: #{tpu_custom_call.1} parent=11 // pred_check_branch
          %186 = sbr.rel (%p184) target = $region20
        $region19: #{tpu_custom_call.1} parent=11 // pred_region
          %188 = vsyncadd [#allocation6], 0
          %s189 = sshll.u32 %s2, 4
          %s190 = int_to_ptr.hbm [resolvable:$true] %s189
          %s191 = sshll.u32 [#allocation7], 4
          %s192 = int_to_ptr.vmem [resolvable:$true] %s191
          %197 = dma.hbm_to_vmem [thread:$0]  %s190, 48, %s192, [#allocation6], 16, 16, 1
        $region20: #{tpu_custom_call.1} parent=11 // pred_fallthru
          _
        // Predicated region
        $region21: #{tpu_custom_call.1} parent=11 // pred_check
          %p198 = pneg %p108
        $region22: #{tpu_custom_call.1} parent=11 // pred_check_branch
          %200 = sbr.rel (%p198) target = $region24
        $region23: #{tpu_custom_call.1} parent=11 // pred_region
          _
        $region24: #{tpu_custom_call.1} parent=11 // pred_fallthru
          _
        // Predicated region
        $region25: #{tpu_custom_call.1} parent=11 // pred_check
          %p201 = pneg %p129
        $region26: #{tpu_custom_call.1} parent=11 // pred_check_branch
          %203 = sbr.rel (%p201) target = $region28
        $region27: #{tpu_custom_call.1} parent=11 // pred_region
          %205 = vsyncadd [#allocation9], 0
          %s206 = sshll.u32 %s4, 4
          %s207 = int_to_ptr.hbm [resolvable:$true] %s206
          %s208 = sshll.u32 [#allocation8], 4
          %s209 = int_to_ptr.vmem [resolvable:$true] %s208
          %214 = dma.hbm_to_vmem [thread:$0]  %s207, 32, %s209, [#allocation9], 16, 16, 1
        $region28: #{tpu_custom_call.1} parent=11 // pred_fallthru
          _
      $region12: #{tpu_custom_call.1} parent=5 // pred_fallthru
        _
      %p215 = scmp.lt.s32.totalorder %s19, 2
      // Predicated region
      $region29: #{tpu_custom_call.1} parent=5 // pred_check
        %p216 = pneg %p215
      $region30: #{tpu_custom_call.1} parent=5 // pred_check_branch
        %218 = sbr.rel (%p216) target = $region32
      $region31: #{tpu_custom_call.1} parent=5 // pred_region
        // Predicated region
        $region33: #{tpu_custom_call.1} parent=31 // pred_check
          %p219 = pneg %p39
        $region34: #{tpu_custom_call.1} parent=31 // pred_check_branch
          %221 = sbr.rel (%p219) target = $region36
        $region35: #{tpu_custom_call.1} parent=31 // pred_region
          %s222 = sand.u32 %s29, 1
          %s223 = scalar_lea.sflag [#allocation3], %s222
          %s224 = sand.u32 %s29, 1
          %s225 = smul.addr %s224, 16
          %s226 = scalar_lea.vmem [#allocation2], %s225
          %s227 = smul.u32 4, %s19
          %229 = vsyncadd %s223, 0
          %s230 = smul.addr %s227, 4
          %s231 = scalar_lea.hbm %s0, %s230
          %s232 = sshll.u32 %s231, 4
          %s233 = int_to_ptr.hbm [resolvable:$true] %s232
          %s234 = sshll.u32 %s226, 4
          %s235 = int_to_ptr.vmem [resolvable:$true] %s234
          %240 = dma.hbm_to_vmem [thread:$0]  %s233, 256, %s235, %s223, 64, 64, 4
        $region36: #{tpu_custom_call.1} parent=31 // pred_fallthru
          _
      $region32: #{tpu_custom_call.1} parent=5 // pred_fallthru
        _
      %p241 = scmp.le.s32.totalorder 1, %s19
      %p242 = scmp.lt.s32.totalorder %s19, 3
      %p243 = pnand %p241, %p242
      %p244 = pneg %p243
      // Predicated region
      $region37: #{tpu_custom_call.1} parent=5 // pred_check
        _
      $region38: #{tpu_custom_call.1} parent=5 // pred_check_branch
        %246 = sbr.rel (%p243) target = $region40
      $region39: #{tpu_custom_call.1} parent=5 // pred_region
        %s247 = ssub.s32 %s19, 1
        %s248 = sand.u32 %s32, 1
        %s249 = scalar_lea.sflag [#allocation3], %s248
        %s250 = sand.u32 %s32, 1
        %s251 = smul.addr %s250, 16
        %s252 = scalar_lea.vmem [#allocation2], %s251
        // Predicated region
        $region41: #{tpu_custom_call.1} parent=39 // pred_check
          %p253 = pneg %p45
        $region42: #{tpu_custom_call.1} parent=39 // pred_check_branch
          %255 = sbr.rel (%p253) target = $region44
        $region43: #{tpu_custom_call.1} parent=39 // pred_region
          %257 = dma.done %s249, 256
        $region44: #{tpu_custom_call.1} parent=39 // pred_fallthru
          _
        // Predicated region
        $region45: #{tpu_custom_call.1} parent=39 // pred_check
          %p258 = pneg %p66
        $region46: #{tpu_custom_call.1} parent=39 // pred_check_branch
          %260 = sbr.rel (%p258) target = $region48
        $region47: #{tpu_custom_call.1} parent=39 // pred_region
          %262 = dma.done [#allocation6], 3072
        $region48: #{tpu_custom_call.1} parent=39 // pred_fallthru
          _
        // Predicated region
        $region49: #{tpu_custom_call.1} parent=39 // pred_check
          %p263 = pneg %p87
        $region50: #{tpu_custom_call.1} parent=39 // pred_check_branch
          %265 = sbr.rel (%p263) target = $region52
        $region51: #{tpu_custom_call.1} parent=39 // pred_region
          %267 = dma.done [#allocation6], 48
        $region52: #{tpu_custom_call.1} parent=39 // pred_fallthru
          _
        // Predicated region
        $region53: #{tpu_custom_call.1} parent=39 // pred_check
          %p268 = pneg %p129
        $region54: #{tpu_custom_call.1} parent=39 // pred_check_branch
          %270 = sbr.rel (%p268) target = $region56
        $region55: #{tpu_custom_call.1} parent=39 // pred_region
          %272 = dma.done [#allocation9], 32
        $region56: #{tpu_custom_call.1} parent=39 // pred_fallthru
          _
        %s273 = sand.u32 %s32, 1
        %s274 = scalar_lea.sflag [#allocation3], %s273
        %s275 = sand.u32 %s32, 1
        %s276 = smul.addr %s275, 16
        %s277 = scalar_lea.vmem [#allocation2], %s276
        %p278 = pneg %p45
        %p279 = pneg %p42
        %p280 = pneg %p66
        %p281 = pneg %p63
        %p282 = pneg %p87
        %p283 = pneg %p84
        %p284 = pneg %p108
        %p285 = pneg %p105
        %p286 = pneg %p129
        %p287 = pneg %p126
        %p288 = pneg %p155
        %p289 = pneg %p152
        %s290 = sand.u32 %s142, 1
        %s291 = scalar_lea.sflag [#allocation4], %s290
        %s292 = sand.u32 %s142, 1
        %s293 = smul.addr %s292, 32
        %s294 = scalar_lea.vmem [#allocation10], %s293
        %s295 = smul.u32 4, %s24
        %s296 = smul.u32 4, %s24
        %v297 = vld [vmem:[%s252] sm:$0xf]
        %v298 = vld [vmem:[%s252 + $0x4] sm:$0xf]
        %v299 = vld [vmem:[%s252 + $0x8] sm:$0xf]
        %v300 = vld [vmem:[%s252 + $0xc] sm:$0xf]
        %v301 = vld [vmem:[#allocation5] sm:$0xf]
        %v302 = vld [vmem:[#allocation5 + $0x4] sm:$0xf]
        %v303 = vld [vmem:[#allocation5 + $0x8] sm:$0xf]
        %v304 = vld [vmem:[#allocation5 + $0xc] sm:$0xf]
        %v305 = vld [vmem:[#allocation5 + $0x10] sm:$0xf]
        %v306 = vld [vmem:[#allocation5 + $0x14] sm:$0xf]
        %v307 = vld [vmem:[#allocation5 + $0x18] sm:$0xf]
        %v308 = vld [vmem:[#allocation5 + $0x1c] sm:$0xf]
        %v309 = vld [vmem:[#allocation5 + $0x20] sm:$0xf]
        %v310 = vld [vmem:[#allocation5 + $0x24] sm:$0xf]
        %v311 = vld [vmem:[#allocation5 + $0x28] sm:$0xf]
        %v312 = vld [vmem:[#allocation5 + $0x2c] sm:$0xf]
        %v313 = vld [vmem:[#allocation5 + $0x30] sm:$0xf]
        %v314 = vld [vmem:[#allocation5 + $0x34] sm:$0xf]
        %v315 = vld [vmem:[#allocation5 + $0x38] sm:$0xf]
        %v316 = vld [vmem:[#allocation5 + $0x3c] sm:$0xf]
        %v317 = vld [vmem:[#allocation7] sm:$0x1]
        %v319 = vperm.slane %v317, 0
        %v325 = vunpack.c.l.b16 %v297
        %v326 = vunpack.c.l.b16 %v298
        %v327 = vunpack.c.l.b16 %v299
        %v328 = vunpack.c.l.b16 %v300
        %v329 = vpack.c.b16 %v326, %v325
        %v330 = vpack.c.b16 %v328, %v327
        %v349 = vunpack.c.l.b16 %v301
        %v350 = vunpack.c.l.b16 %v302
        %v351 = vunpack.c.l.b16 %v303
        %v352 = vunpack.c.l.b16 %v304
        %v353 = vunpack.c.l.b16 %v305
        %v354 = vunpack.c.l.b16 %v306
        %v355 = vunpack.c.l.b16 %v307
        %v356 = vunpack.c.l.b16 %v308
        %v357 = vunpack.c.l.b16 %v309
        %v358 = vunpack.c.l.b16 %v310
        %v359 = vunpack.c.l.b16 %v311
        %v360 = vunpack.c.l.b16 %v312
        %v361 = vunpack.c.l.b16 %v313
        %v362 = vunpack.c.l.b16 %v314
        %v363 = vunpack.c.l.b16 %v315
        %v364 = vunpack.c.l.b16 %v316
        %v365 = vpack.c.b16 %v350, %v349
        %v366 = vpack.c.b16 %v352, %v351
        %v367 = vpack.c.b16 %v354, %v353
        %v368 = vpack.c.b16 %v356, %v355
        %v369 = vpack.c.b16 %v358, %v357
        %v370 = vpack.c.b16 %v360, %v359
        %v371 = vpack.c.b16 %v362, %v361
        %v372 = vpack.c.b16 %v364, %v363
        %381 = vmatpush.bf16.msra.mxu0 %v372
        %382 = vmatpush.bf16.msra.mxu0 %v371
        %383 = vmatpush.bf16.msra.mxu0 %v370
        %384 = vmatpush.bf16.msra.mxu0 %v369
        %385 = vmatpush.bf16.msra.mxu0 %v368
        %386 = vmatpush.bf16.msra.mxu0 %v367
        %387 = vmatpush.bf16.msra.mxu0 %v366
        %388 = vmatpush.bf16.msra.mxu0 %v365
        %389 = vmatmul.bf16.gmra.mxu0 %v329
        %v390 = vpop.f32.mrf.mxu0
        %v391 = vadd.f32 %v319, %v390
        %v392 = vpop.f32.mrf.mxu0
        %v393 = vadd.f32 %v319, %v392
        %394 = vmatmul.bf16.gmra.mxu0 %v330
        %v395 = vpop.f32.mrf.mxu0
        %v396 = vadd.f32 %v319, %v395
        %v397 = vpop.f32.mrf.mxu0
        %v398 = vadd.f32 %v319, %v397
        %399 = vdwg.mxu0
        %400 = vadd.xlane.f32.xlu0 %v391
        %v401 = vpop.xlane.xlu0 %400
        %402 = vadd.xlane.f32.xlu0 %v393
        %v403 = vpop.xlane.xlu0 %402
        %404 = vadd.xlane.f32.xlu0 %v396
        %v405 = vpop.xlane.xlu0 %404
        %406 = vadd.xlane.f32.xlu0 %v398
        %v407 = vpop.xlane.xlu0 %406
        %v408 = vrcp.pop 128.0
        %v409 = vmul.f32 128.0, %v408
        %v410 = vsub.f32 1.0, %v409
        %v411 = vmul.f32 %v408, %v410
        %v412 = vadd.f32 %v408, %v411
        %vm413 = vweird.f32 %v408
        %v414 = vsel %vm413, %v408, %v412
        %v415 = vmul.f32 %v401, %v414
        %v416 = vmul.f32 %v403, %v414
        %v417 = vmul.f32 %v405, %v414
        %v418 = vmul.f32 %v407, %v414
        %v419 = vsub.f32 %v391, %v415
        %v420 = vsub.f32 %v393, %v416
        %v421 = vsub.f32 %v396, %v417
        %v422 = vsub.f32 %v398, %v418
        %v423 = vmul.f32 %v419, %v419
        %v424 = vmul.f32 %v420, %v420
        %v425 = vmul.f32 %v421, %v421
        %v426 = vmul.f32 %v422, %v422
        %427 = vadd.xlane.f32.xlu0 %v423
        %v428 = vpop.xlane.xlu0 %427
        %429 = vadd.xlane.f32.xlu0 %v424
        %v430 = vpop.xlane.xlu0 %429
        %431 = vadd.xlane.f32.xlu0 %v425
        %v432 = vpop.xlane.xlu0 %431
        %433 = vadd.xlane.f32.xlu0 %v426
        %v434 = vpop.xlane.xlu0 %433
        %v435 = vmul.f32 %v428, %v414
        %v436 = vmul.f32 %v430, %v414
        %v437 = vmul.f32 %v432, %v414
        %v438 = vmul.f32 %v434, %v414
        %v439 = vadd.f32 %v435, 1e-12
        %v440 = vadd.f32 %v436, 1e-12
        %v441 = vadd.f32 %v437, 1e-12
        %v442 = vadd.f32 %v438, 1e-12
        %v443 = vrsqrt.pop %v439
        %v444 = vmul.f32 %v443, %v439
        %v445 = vmul.f32 %v444, %v443
        %v446 = vmul.f32 0.5, %v445
        %v447 = vsub.f32 1.5, %v446
        %v448 = vmul.f32 %v443, %v447
        %vm449 = vweird.f32 %v439
        %vm450 = vweird.f32 %v443
        %vm451 = vmor %vm449, %vm450
        %v452 = vsel %vm451, %v443, %v448
        %v453 = vrsqrt.pop %v440
        %v454 = vmul.f32 %v453, %v440
        %v455 = vmul.f32 %v454, %v453
        %v456 = vmul.f32 0.5, %v455
        %v457 = vsub.f32 1.5, %v456
        %v458 = vmul.f32 %v453, %v457
        %vm459 = vweird.f32 %v440
        %vm460 = vweird.f32 %v453
        %vm461 = vmor %vm459, %vm460
        %v462 = vsel %vm461, %v453, %v458
        %v463 = vrsqrt.pop %v441
        %v464 = vmul.f32 %v463, %v441
        %v465 = vmul.f32 %v464, %v463
        %v466 = vmul.f32 0.5, %v465
        %v467 = vsub.f32 1.5, %v466
        %v468 = vmul.f32 %v463, %v467
        %vm469 = vweird.f32 %v441
        %vm470 = vweird.f32 %v463
        %vm471 = vmor %vm469, %vm470
        %v472 = vsel %vm471, %v463, %v468
        %v473 = vrsqrt.pop %v442
        %v474 = vmul.f32 %v473, %v442
        %v475 = vmul.f32 %v474, %v473
        %v476 = vmul.f32 0.5, %v475
        %v477 = vsub.f32 1.5, %v476
        %v478 = vmul.f32 %v473, %v477
        %vm479 = vweird.f32 %v442
        %vm480 = vweird.f32 %v473
        %vm481 = vmor %vm479, %vm480
        %v482 = vsel %vm481, %v473, %v478
        %v483 = vmul.f32 %v419, %v452
        %v484 = vmul.f32 %v420, %v462
        %v485 = vmul.f32 %v421, %v472
        %v486 = vmul.f32 %v422, %v482
        %v487 = vld [vmem:[%s3] sm:$0x1]
        %v489 = vperm.slane %v487, 0
        %v491 = vmul.f32 %v483, %v489
        %v492 = vmul.f32 %v484, %v489
        %v493 = vmul.f32 %v485, %v489
        %v494 = vmul.f32 %v486, %v489
        %v495 = vld [vmem:[#allocation8] sm:$0x1]
        %v497 = vperm.slane %v495, 0
        %v499 = vadd.f32 %v491, %v497
        %v500 = vadd.f32 %v492, %v497
        %v501 = vadd.f32 %v493, %v497
        %v502 = vadd.f32 %v494, %v497
        %v503 = vmax.f32 %v499, 0.0
        %v504 = vmax.f32 %v500, 0.0
        %v505 = vmax.f32 %v501, 0.0
        %v506 = vmax.f32 %v502, 0.0
        %v507 = vpack.c.bf16 %v504, %v503
        %v508 = vpack.c.bf16 %v506, %v505
        %s509 = scalar_lea.vmem [#allocation5], 64
        %v510 = vld [vmem:[%s509] sm:$0xf]
        %v511 = vld [vmem:[%s509 + $0x4] sm:$0xf]
        %v512 = vld [vmem:[%s509 + $0x8] sm:$0xf]
        %v513 = vld [vmem:[%s509 + $0xc] sm:$0xf]
        %v514 = vld [vmem:[%s509 + $0x10] sm:$0xf]
        %v515 = vld [vmem:[%s509 + $0x14] sm:$0xf]
        %v516 = vld [vmem:[%s509 + $0x18] sm:$0xf]
        %v517 = vld [vmem:[%s509 + $0x1c] sm:$0xf]
        %v518 = vld [vmem:[%s509 + $0x20] sm:$0xf]
        %v519 = vld [vmem:[%s509 + $0x24] sm:$0xf]
        %v520 = vld [vmem:[%s509 + $0x28] sm:$0xf]
        %v521 = vld [vmem:[%s509 + $0x2c] sm:$0xf]
        %v522 = vld [vmem:[%s509 + $0x30] sm:$0xf]
        %v523 = vld [vmem:[%s509 + $0x34] sm:$0xf]
        %v524 = vld [vmem:[%s509 + $0x38] sm:$0xf]
        %v525 = vld [vmem:[%s509 + $0x3c] sm:$0xf]
        %s526 = scalar_lea.vmem [#allocation7], 1
        %v527 = vld [vmem:[%s526] sm:$0x1]
        %v529 = vperm.slane %v527, 0
        %v547 = vunpack.c.l.b16 %v510
        %v548 = vunpack.c.l.b16 %v511
        %v549 = vunpack.c.l.b16 %v512
        %v550 = vunpack.c.l.b16 %v513
        %v551 = vunpack.c.l.b16 %v514
        %v552 = vunpack.c.l.b16 %v515
        %v553 = vunpack.c.l.b16 %v516
        %v554 = vunpack.c.l.b16 %v517
        %v555 = vunpack.c.l.b16 %v518
        %v556 = vunpack.c.l.b16 %v519
        %v557 = vunpack.c.l.b16 %v520
        %v558 = vunpack.c.l.b16 %v521
        %v559 = vunpack.c.l.b16 %v522
        %v560 = vunpack.c.l.b16 %v523
        %v561 = vunpack.c.l.b16 %v524
        %v562 = vunpack.c.l.b16 %v525
        %v563 = vpack.c.b16 %v548, %v547
        %v564 = vpack.c.b16 %v550, %v549
        %v565 = vpack.c.b16 %v552, %v551
        %v566 = vpack.c.b16 %v554, %v553
        %v567 = vpack.c.b16 %v556, %v555
        %v568 = vpack.c.b16 %v558, %v557
        %v569 = vpack.c.b16 %v560, %v559
        %v570 = vpack.c.b16 %v562, %v561
        %579 = vmatpush.bf16.msra.mxu0 %v570
        %580 = vmatpush.bf16.msra.mxu0 %v569
        %581 = vmatpush.bf16.msra.mxu0 %v568
        %582 = vmatpush.bf16.msra.mxu0 %v567
        %583 = vmatpush.bf16.msra.mxu0 %v566
        %584 = vmatpush.bf16.msra.mxu0 %v565
        %585 = vmatpush.bf16.msra.mxu0 %v564
        %586 = vmatpush.bf16.msra.mxu0 %v563
        %587 = vmatmul.bf16.gmra.mxu0 %v507
        %v588 = vpop.f32.mrf.mxu0
        %v589 = vadd.f32 %v529, %v588
        %v590 = vpop.f32.mrf.mxu0
        %v591 = vadd.f32 %v529, %v590
        %592 = vmatmul.bf16.gmra.mxu0 %v508
        %v593 = vpop.f32.mrf.mxu0
        %v594 = vadd.f32 %v529, %v593
        %v595 = vpop.f32.mrf.mxu0
        %v596 = vadd.f32 %v529, %v595
        %597 = vdwg.mxu0
        %598 = vadd.xlane.f32.xlu0 %v589
        %v599 = vpop.xlane.xlu0 %598
        %600 = vadd.xlane.f32.xlu0 %v591
        %v601 = vpop.xlane.xlu0 %600
        %602 = vadd.xlane.f32.xlu0 %v594
        %v603 = vpop.xlane.xlu0 %602
        %604 = vadd.xlane.f32.xlu0 %v596
        %v605 = vpop.xlane.xlu0 %604
        %v606 = vmul.f32 %v599, %v414
        %v607 = vmul.f32 %v601, %v414
        %v608 = vmul.f32 %v603, %v414
        %v609 = vmul.f32 %v605, %v414
        %v610 = vsub.f32 %v589, %v606
        %v611 = vsub.f32 %v591, %v607
        %v612 = vsub.f32 %v594, %v608
        %v613 = vsub.f32 %v596, %v609
        %v614 = vmul.f32 %v610, %v610
        %v615 = vmul.f32 %v611, %v611
        %v616 = vmul.f32 %v612, %v612
        %v617 = vmul.f32 %v613, %v613
        %618 = vadd.xlane.f32.xlu0 %v614
        %v619 = vpop.xlane.xlu0 %618
        %620 = vadd.xlane.f32.xlu0 %v615
        %v621 = vpop.xlane.xlu0 %620
        %622 = vadd.xlane.f32.xlu0 %v616
        %v623 = vpop.xlane.xlu0 %622
        %624 = vadd.xlane.f32.xlu0 %v617
        %v625 = vpop.xlane.xlu0 %624
        %v626 = vmul.f32 %v619, %v414
        %v627 = vmul.f32 %v621, %v414
        %v628 = vmul.f32 %v623, %v414
        %v629 = vmul.f32 %v625, %v414
        %v630 = vadd.f32 %v626, 1e-12
        %v631 = vadd.f32 %v627, 1e-12
        %v632 = vadd.f32 %v628, 1e-12
        %v633 = vadd.f32 %v629, 1e-12
        %v634 = vrsqrt.pop %v630
        %v635 = vmul.f32 %v634, %v630
        %v636 = vmul.f32 %v635, %v634
        %v637 = vmul.f32 0.5, %v636
        %v638 = vsub.f32 1.5, %v637
        %v639 = vmul.f32 %v634, %v638
        %vm640 = vweird.f32 %v630
        %vm641 = vweird.f32 %v634
        %vm642 = vmor %vm640, %vm641
        %v643 = vsel %vm642, %v634, %v639
        %v644 = vrsqrt.pop %v631
        %v645 = vmul.f32 %v644, %v631
        %v646 = vmul.f32 %v645, %v644
        %v647 = vmul.f32 0.5, %v646
        %v648 = vsub.f32 1.5, %v647
        %v649 = vmul.f32 %v644, %v648
        %vm650 = vweird.f32 %v631
        %vm651 = vweird.f32 %v644
        %vm652 = vmor %vm650, %vm651
        %v653 = vsel %vm652, %v644, %v649
        %v654 = vrsqrt.pop %v632
        %v655 = vmul.f32 %v654, %v632
        %v656 = vmul.f32 %v655, %v654
        %v657 = vmul.f32 0.5, %v656
        %v658 = vsub.f32 1.5, %v657
        %v659 = vmul.f32 %v654, %v658
        %vm660 = vweird.f32 %v632
        %vm661 = vweird.f32 %v654
        %vm662 = vmor %vm660, %vm661
        %v663 = vsel %vm662, %v654, %v659
        %v664 = vrsqrt.pop %v633
        %v665 = vmul.f32 %v664, %v633
        %v666 = vmul.f32 %v665, %v664
        %v667 = vmul.f32 0.5, %v666
        %v668 = vsub.f32 1.5, %v667
        %v669 = vmul.f32 %v664, %v668
        %vm670 = vweird.f32 %v633
        %vm671 = vweird.f32 %v664
        %vm672 = vmor %vm670, %vm671
        %v673 = vsel %vm672, %v664, %v669
        %v674 = vmul.f32 %v610, %v643
        %v675 = vmul.f32 %v611, %v653
        %v676 = vmul.f32 %v612, %v663
        %v677 = vmul.f32 %v613, %v673
        %s678 = scalar_lea.vmem %s3, 1
        %v679 = vld [vmem:[%s678] sm:$0x1]
        %v681 = vperm.slane %v679, 0
        %v683 = vmul.f32 %v674, %v681
        %v684 = vmul.f32 %v675, %v681
        %v685 = vmul.f32 %v676, %v681
        %v686 = vmul.f32 %v677, %v681
        %s687 = scalar_lea.vmem [#allocation8], 1
        %v688 = vld [vmem:[%s687] sm:$0x1]
        %v690 = vperm.slane %v688, 0
        %v692 = vadd.f32 %v683, %v690
        %v693 = vadd.f32 %v684, %v690
        %v694 = vadd.f32 %v685, %v690
        %v695 = vadd.f32 %v686, %v690
        %v696 = vmax.f32 %v692, 0.0
        %v697 = vmax.f32 %v693, 0.0
        %v698 = vmax.f32 %v694, 0.0
        %v699 = vmax.f32 %v695, 0.0
        %v700 = vpack.c.bf16 %v697, %v696
        %v701 = vpack.c.bf16 %v699, %v698
        %s702 = scalar_lea.vmem [#allocation5], 128
        %v703 = vld [vmem:[%s702] sm:$0xf]
        %v704 = vld [vmem:[%s702 + $0x4] sm:$0xf]
        %v705 = vld [vmem:[%s702 + $0x8] sm:$0xf]
        %v706 = vld [vmem:[%s702 + $0xc] sm:$0xf]
        %v707 = vld [vmem:[%s702 + $0x10] sm:$0xf]
        %v708 = vld [vmem:[%s702 + $0x14] sm:$0xf]
        %v709 = vld [vmem:[%s702 + $0x18] sm:$0xf]
        %v710 = vld [vmem:[%s702 + $0x1c] sm:$0xf]
        %v711 = vld [vmem:[%s702 + $0x20] sm:$0xf]
        %v712 = vld [vmem:[%s702 + $0x24] sm:$0xf]
        %v713 = vld [vmem:[%s702 + $0x28] sm:$0xf]
        %v714 = vld [vmem:[%s702 + $0x2c] sm:$0xf]
        %v715 = vld [vmem:[%s702 + $0x30] sm:$0xf]
        %v716 = vld [vmem:[%s702 + $0x34] sm:$0xf]
        %v717 = vld [vmem:[%s702 + $0x38] sm:$0xf]
        %v718 = vld [vmem:[%s702 + $0x3c] sm:$0xf]
        %s719 = scalar_lea.vmem [#allocation7], 2
        %v720 = vld [vmem:[%s719] sm:$0x1]
        %v722 = vperm.slane %v720, 0
        %v740 = vunpack.c.l.b16 %v703
        %v741 = vunpack.c.l.b16 %v704
        %v742 = vunpack.c.l.b16 %v705
        %v743 = vunpack.c.l.b16 %v706
        %v744 = vunpack.c.l.b16 %v707
        %v745 = vunpack.c.l.b16 %v708
        %v746 = vunpack.c.l.b16 %v709
        %v747 = vunpack.c.l.b16 %v710
        %v748 = vunpack.c.l.b16 %v711
        %v749 = vunpack.c.l.b16 %v712
        %v750 = vunpack.c.l.b16 %v713
        %v751 = vunpack.c.l.b16 %v714
        %v752 = vunpack.c.l.b16 %v715
        %v753 = vunpack.c.l.b16 %v716
        %v754 = vunpack.c.l.b16 %v717
        %v755 = vunpack.c.l.b16 %v718
        %v756 = vpack.c.b16 %v741, %v740
        %v757 = vpack.c.b16 %v743, %v742
        %v758 = vpack.c.b16 %v745, %v744
        %v759 = vpack.c.b16 %v747, %v746
        %v760 = vpack.c.b16 %v749, %v748
        %v761 = vpack.c.b16 %v751, %v750
        %v762 = vpack.c.b16 %v753, %v752
        %v763 = vpack.c.b16 %v755, %v754
        %772 = vmatpush.bf16.msra.mxu0 %v763
        %773 = vmatpush.bf16.msra.mxu0 %v762
        %774 = vmatpush.bf16.msra.mxu0 %v761
        %775 = vmatpush.bf16.msra.mxu0 %v760
        %776 = vmatpush.bf16.msra.mxu0 %v759
        %777 = vmatpush.bf16.msra.mxu0 %v758
        %778 = vmatpush.bf16.msra.mxu0 %v757
        %779 = vmatpush.bf16.msra.mxu0 %v756
        %780 = vmatmul.bf16.gmra.mxu0 %v700
        %v781 = vpop.f32.mrf.mxu0
        %v782 = vadd.f32 %v722, %v781
        %v783 = vpop.f32.mrf.mxu0
        %v784 = vadd.f32 %v722, %v783
        %785 = vmatmul.bf16.gmra.mxu0 %v701
        %v786 = vpop.f32.mrf.mxu0
        %v787 = vadd.f32 %v722, %v786
        %v788 = vpop.f32.mrf.mxu0
        %v789 = vadd.f32 %v722, %v788
        %790 = vdwg.mxu0
        %791 = vst [vmem:[%s294] sm:$0xff] %v782
        %792 = vst [vmem:[%s294 + $0x8] sm:$0xff] %v784
        %793 = vst [vmem:[%s294 + $0x10] sm:$0xff] %v787
        %794 = vst [vmem:[%s294 + $0x18] sm:$0xff] %v789
        %s795 = sand.u32 %s142, 1
        %s796 = scalar_lea.sflag [#allocation4], %s795
        %s797 = sand.u32 %s142, 1
        %s798 = smul.addr %s797, 32
        %s799 = scalar_lea.vmem [#allocation10], %s798
        // Predicated region
        $region57: #{tpu_custom_call.1} parent=39 // pred_check
          %p800 = pneg %p152
        $region58: #{tpu_custom_call.1} parent=39 // pred_check_branch
          %802 = sbr.rel (%p800) target = $region60
        $region59: #{tpu_custom_call.1} parent=39 // pred_region
          %s803 = smul.u32 4, %s24
          %805 = vsyncadd %s796, 0
          %s806 = smul.addr %s803, 8
          %s807 = scalar_lea.hbm %s5, %s806
          %s808 = sshll.u32 %s799, 4
          %s809 = int_to_ptr.vmem [resolvable:$true] %s808
          %s810 = sshll.u32 %s807, 4
          %s811 = int_to_ptr.hbm [resolvable:$true] %s810
          %816 = dma.vmem_to_hbm [thread:$0]  %s809, 512, %s811, %s796, 128, 128, 8
        $region60: #{tpu_custom_call.1} parent=39 // pred_fallthru
          _
      $region40: #{tpu_custom_call.1} parent=5 // pred_fallthru
        _
      %p817 = scmp.le.s32.totalorder 2, %s19
      // Predicated region
      $region61: #{tpu_custom_call.1} parent=5 // pred_check
        %p818 = pneg %p817
      $region62: #{tpu_custom_call.1} parent=5 // pred_check_branch
        %820 = sbr.rel (%p818) target = $region64
      $region63: #{tpu_custom_call.1} parent=5 // pred_region
        %s821 = ssub.s32 %s19, 2
        // Predicated region
        $region65: #{tpu_custom_call.1} parent=63 // pred_check
          %p822 = pneg %p158
        $region66: #{tpu_custom_call.1} parent=63 // pred_check_branch
          %824 = sbr.rel (%p822) target = $region68
        $region67: #{tpu_custom_call.1} parent=63 // pred_region
          %s825 = sand.u32 %s143, 1
          %s826 = scalar_lea.sflag [#allocation4], %s825
          %s827 = sand.u32 %s143, 1
          %s828 = smul.addr %s827, 32
          %s829 = scalar_lea.vmem [#allocation10], %s828
          %831 = dma.done %s826, 512
        $region68: #{tpu_custom_call.1} parent=63 // pred_fallthru
          _
      $region64: #{tpu_custom_call.1} parent=5 // pred_fallthru
        _
    $region6: #{tpu_custom_call.1} parent=1 // loop_footer
      %s23 = sadd.s32 1, %s19
    $region7: #{tpu_custom_call.1} parent=1 // loop_footer_branch
      %18 = sbr.rel target = $region3
    $region8: #{tpu_custom_call.1} parent=1 // loop_exit
      _
    %832 = vsyncpa [#allocation3], 1
    %s833 = scalar_lea.sflag [#allocation3], 1
    %834 = vsyncpa %s833, 1
    %835 = vsyncpa [#allocation6], 1
    %836 = vsyncpa [#allocation9], 1
    %837 = vsyncpa [#allocation4], 1
    %s838 = scalar_lea.sflag [#allocation4], 1
    %839 = vsyncpa %s838, 1

// kernel: tpu_custom_call.1
$region0: #{tpu_custom_call.1}
  #allocation0 [shape = 'u32[]', space=smem, size = 0x4, offset = 0x4, fixed_abs, tag = 'smem constant byte address 0x4 - core index']
  #allocation1 [shape = 'u32[72,128]{1,0:T(1,128)}', space=vmem, size = 0x9000, scoped, tag = 'internal scratch']
  %s0 = inlined_call_operand.hbm [shape: bf16[64,128], index: 0, kind: input, shape index: {}]
  %s1 = inlined_call_operand.hbm [shape: bf16[3,128,128], index: 1, kind: input, shape index: {}]
  %s2 = inlined_call_operand.hbm [shape: f32[3,1,128], index: 2, kind: input, shape index: {}]
  %s3 = inlined_call_operand.vmem [shape: f32[2,1,128], index: 3, kind: input, shape index: {}]
  %s4 = inlined_call_operand.hbm [shape: f32[2,1,128], index: 4, kind: input, shape index: {}]
  %s5 = inlined_call_operand.hbm [shape: f32[64,128], index: 5, kind: output, shape index: {}]
  %s6 = sld [smem:[#allocation0]]
  $region69: #{tpu_custom_call.1} parent=0
    _
  %s8 = ssub.s32 1, %s6
  %s9 = scalar_select 0, %s8, %s6
  $region1: #{tpu_custom_call.1} parent=0
    #allocation2 [shape = 'u8[16384]{0}', space=vmem, size = 0x4000, scoped, tag = 'input window, operand 0']
    #allocation3 [shape = 's32[2]{0}', space=sflag, size = 0x8, scoped, tag = 'scoped memory for tpu_custom_call.1']
    #allocation4 [shape = 's32[2]{0}', space=sflag, size = 0x8, scoped, tag = 'scoped memory for tpu_custom_call.1']
    #allocation5 [shape = 'u8[98304]{0}', space=vmem, size = 0x18000, scoped, tag = 'input window, operand 1, single buffered']
    #allocation6 [shape = 's32[1]{0}', space=sflag, size = 0x4, scoped, tag = 'scoped memory for tpu_custom_call.1']
    #allocation7 [shape = 'u8[1536]{0}', space=vmem, size = 0x800, scoped, tag = 'input window, operand 2, single buffered']
    #allocation8 [shape = 'u8[1024]{0}', space=vmem, size = 0x400, scoped, tag = 'input window, operand 4, single buffered']
    #allocation9 [shape = 's32[1]{0}', space=sflag, size = 0x4, scoped, tag = 'scoped memory for tpu_custom_call.1']
    #allocation10 [shape = 'u8[32768]{0}', space=vmem, size = 0x8000, scoped, tag = 'output window, operand 0']
    %10 = vsyncpa [#allocation3], 0
    %s11 = scalar_lea.sflag [#allocation3], 1
    %12 = vsyncpa %s11, 0
    %13 = vsyncpa [#allocation6], 0
    %14 = vsyncpa [#allocation9], 0
    %15 = vsyncpa [#allocation4], 0
    %s16 = scalar_lea.sflag [#allocation4], 1
    %17 = vsyncpa %s16, 0
    loop: start=0, step=1, limit=4
    $region2: #{tpu_custom_call.1} parent=1 // loop_pre_header
      _
    $region3: #{tpu_custom_call.1} parent=1 // loop_header
      %s19 = sphi 0, %s23
      %p20 = scmp.ge.s32.totalorder %s19, 4
      %s29 = sphi 0, %s31
      %s32 = sphi 0, %s29
      %s33 = sphi 0, %s32
      %s49 = sphi 0, %s33
      %s53 = sphi 0, %s53
      %s55 = sphi 0, %s53
      %s56 = sphi 0, %s55
      %s70 = sphi 0, %s56
      %s74 = sphi 0, %s74
      %s76 = sphi 0, %s74
      %s77 = sphi 0, %s76
      %s91 = sphi 0, %s77
      %s95 = sphi 0, %s95
      %s97 = sphi 0, %s95
      %s98 = sphi 0, %s97
      %s112 = sphi 0, %s98
      %s116 = sphi 0, %s116
      %s118 = sphi 0, %s116
      %s119 = sphi 0, %s118
      %s133 = sphi 0, %s119
      %s139 = sphi 0, %s141
      %s142 = sphi 0, %s139
      %s143 = sphi 0, %s142
      %s159 = sphi 0, %s143
    $region4: #{tpu_custom_call.1} parent=1 // loop_header_branch
      %22 = sbr.rel (%p20) target = $region8
    $region5: #{tpu_custom_call.1} parent=1 // loop_body
      %s24 = ssub.s32 %s19, 1
      %s25 = ssub.s32 %s19, 2
      %s26 = sadd.s32 %s19, 1
      %s27 = ssub.s32 %s19, %s26
      %p28 = scmp.eq.s32.totalorder %s27, 0
      %s30 = sadd.s32 %s29, 1
      %s31 = scalar_select %p28, %s29, %s30
      %p34 = pneg %p28
      %p35 = scmp.eq.s32.totalorder %s19, 1
      %p36 = por %p34, %p35
      %p37 = scmp.ne.s32.totalorder %s29, %s32
      %p38 = scmp.eq.s32.totalorder %s19, 0
      %p39 = por %p37, %p38
      %p40 = scmp.ne.s32.totalorder %s29, %s32
      %p41 = scmp.eq.s32.totalorder %s24, 1
      %p42 = por %p40, %p41
      %p43 = scmp.ne.s32.totalorder %s32, %s33
      %p44 = scmp.eq.s32.totalorder %s24, 0
      %p45 = por %p43, %p44
      %p46 = scmp.ne.s32.totalorder %s32, %s33
      %p47 = scmp.eq.s32.totalorder %s25, 1
      %p48 = por %p46, %p47
      %p50 = scmp.ne.s32.totalorder %s33, %s49
      %p51 = scmp.eq.s32.totalorder %s25, 0
      %p52 = por %p50, %p51
      %s54 = sadd.s32 %s53, 1
      %p57 = scmp.eq.s32.totalorder %s19, 1
      %p58 = scmp.ne.s32.totalorder %s53, %s55
      %p59 = scmp.eq.s32.totalorder %s19, 0
      %p60 = por %p58, %p59
      %p61 = scmp.ne.s32.totalorder %s53, %s55
      %p62 = scmp.eq.s32.totalorder %s24, 1
      %p63 = por %p61, %p62
      %p64 = scmp.ne.s32.totalorder %s55, %s56
      %p65 = scmp.eq.s32.totalorder %s24, 0
      %p66 = por %p64, %p65
      %p67 = scmp.ne.s32.totalorder %s55, %s56
      %p68 = scmp.eq.s32.totalorder %s25, 1
      %p69 = por %p67, %p68
      %p71 = scmp.ne.s32.totalorder %s56, %s70
      %p72 = scmp.eq.s32.totalorder %s25, 0
      %p73 = por %p71, %p72
      %s75 = sadd.s32 %s74, 1
      %p78 = scmp.eq.s32.totalorder %s19, 1
      %p79 = scmp.ne.s32.totalorder %s74, %s76
      %p80 = scmp.eq.s32.totalorder %s19, 0
      %p81 = por %p79, %p80
      %p82 = scmp.ne.s32.totalorder %s74, %s76
      %p83 = scmp.eq.s32.totalorder %s24, 1
      %p84 = por %p82, %p83
      %p85 = scmp.ne.s32.totalorder %s76, %s77
      %p86 = scmp.eq.s32.totalorder %s24, 0
      %p87 = por %p85, %p86
      %p88 = scmp.ne.s32.totalorder %s76, %s77
      %p89 = scmp.eq.s32.totalorder %s25, 1
      %p90 = por %p88, %p89
      %p92 = scmp.ne.s32.totalorder %s77, %s91
      %p93 = scmp.eq.s32.totalorder %s25, 0
      %p94 = por %p92, %p93
      %s96 = sadd.s32 %s95, 1
      %p99 = scmp.eq.s32.totalorder %s19, 1
      %p100 = scmp.ne.s32.totalorder %s95, %s97
      %p101 = scmp.eq.s32.totalorder %s19, 0
      %p102 = por %p100, %p101
      %p103 = scmp.ne.s32.totalorder %s95, %s97
      %p104 = scmp.eq.s32.totalorder %s24, 1
      %p105 = por %p103, %p104
      %p106 = scmp.ne.s32.totalorder %s97, %s98
      %p107 = scmp.eq.s32.totalorder %s24, 0
      %p108 = por %p106, %p107
      %p109 = scmp.ne.s32.totalorder %s97, %s98
      %p110 = scmp.eq.s32.totalorder %s25, 1
      %p111 = por %p109, %p110
      %p113 = scmp.ne.s32.totalorder %s98, %s112
      %p114 = scmp.eq.s32.totalorder %s25, 0
      %p115 = por %p113, %p114
      %s117 = sadd.s32 %s116, 1
      %p120 = scmp.eq.s32.totalorder %s19, 1
      %p121 = scmp.ne.s32.totalorder %s116, %s118
      %p122 = scmp.eq.s32.totalorder %s19, 0
      %p123 = por %p121, %p122
      %p124 = scmp.ne.s32.totalorder %s116, %s118
      %p125 = scmp.eq.s32.totalorder %s24, 1
      %p126 = por %p124, %p125
      %p127 = scmp.ne.s32.totalorder %s118, %s119
      %p128 = scmp.eq.s32.totalorder %s24, 0
      %p129 = por %p127, %p128
      %p130 = scmp.ne.s32.totalorder %s118, %s119
      %p131 = scmp.eq.s32.totalorder %s25, 1
      %p132 = por %p130, %p131
      %p134 = scmp.ne.s32.totalorder %s119, %s133
      %p135 = scmp.eq.s32.totalorder %s25, 0
      %p136 = por %p134, %p135
      %s137 = ssub.s32 %s19, %s26
      %p138 = scmp.eq.s32.totalorder %s137, 0
      %s140 = sadd.s32 %s139, 1
      %s141 = scalar_select %p138, %s139, %s140
      %p144 = pneg %p138
      %p145 = scmp.eq.s32.totalorder %s19, 1
      %p146 = por %p144, %p145
      %p147 = scmp.ne.s32.totalorder %s139, %s142
      %p148 = scmp.eq.s32.totalorder %s19, 0
      %p149 = por %p147, %p148
      %p150 = scmp.ne.s32.totalorder %s139, %s142
      %p151 = scmp.eq.s32.totalorder %s24, 1
      %p152 = por %p150, %p151
      %p153 = scmp.ne.s32.totalorder %s142, %s143
      %p154 = scmp.eq.s32.totalorder %s24, 0
      %p155 = por %p153, %p154
      %p156 = scmp.ne.s32.totalorder %s142, %s143
      %p157 = scmp.eq.s32.totalorder %s25, 1
      %p158 = por %p156, %p157
      %p160 = scmp.ne.s32.totalorder %s143, %s159
      %p161 = scmp.eq.s32.totalorder %s25, 0
      %p162 = por %p160, %p161
      %p163 = scmp.le.s32.totalorder 1, %s19
      %p164 = scmp.lt.s32.totalorder %s19, 3
      %p165 = pnand %p163, %p164
      %p166 = pneg %p165
      // Predicated region
      $region9: #{tpu_custom_call.1} parent=5 // pred_check
        _
      $region10: #{tpu_custom_call.1} parent=5 // pred_check_branch
        %168 = sbr.rel (%p165) target = $region12
      $region11: #{tpu_custom_call.1} parent=5 // pred_region
        %s169 = ssub.s32 %s19, 1
        // Predicated region
        $region13: #{tpu_custom_call.1} parent=11 // pred_check
          %p170 = pneg %p66
        $region14: #{tpu_custom_call.1} parent=11 // pred_check_branch
          %172 = sbr.rel (%p170) target = $region16
        $region15: #{tpu_custom_call.1} parent=11 // pred_region
          %174 = vsyncadd [#allocation6], 0
          %s175 = sshll.u32 %s1, 4
          %s176 = int_to_ptr.hbm [resolvable:$true] %s175
          %s177 = sshll.u32 [#allocation5], 4
          %s178 = int_to_ptr.vmem [resolvable:$true] %s177
          %183 = dma.hbm_to_vmem [thread:$0]  %s176, 3072, %s178, [#allocation6], 64, 64, 4
        $region16: #{tpu_custom_call.1} parent=11 // pred_fallthru
          _
        // Predicated region
        $region17: #{tpu_custom_call.1} parent=11 // pred_check
          %p184 = pneg %p87
        $region18: #{tpu_custom_call.1} parent=11 // pred_check_branch
          %186 = sbr.rel (%p184) target = $region20
        $region19: #{tpu_custom_call.1} parent=11 // pred_region
          %188 = vsyncadd [#allocation6], 0
          %s189 = sshll.u32 %s2, 4
          %s190 = int_to_ptr.hbm [resolvable:$true] %s189
          %s191 = sshll.u32 [#allocation7], 4
          %s192 = int_to_ptr.vmem [resolvable:$true] %s191
          %197 = dma.hbm_to_vmem [thread:$0]  %s190, 48, %s192, [#allocation6], 16, 16, 1
        $region20: #{tpu_custom_call.1} parent=11 // pred_fallthru
          _
        // Predicated region
        $region21: #{tpu_custom_call.1} parent=11 // pred_check
          %p198 = pneg %p108
        $region22: #{tpu_custom_call.1} parent=11 // pred_check_branch
          %200 = sbr.rel (%p198) target = $region24
        $region23: #{tpu_custom_call.1} parent=11 // pred_region
          _
        $region24: #{tpu_custom_call.1} parent=11 // pred_fallthru
          _
        // Predicated region
        $region25: #{tpu_custom_call.1} parent=11 // pred_check
          %p201 = pneg %p129
        $region26: #{tpu_custom_call.1} parent=11 // pred_check_branch
          %203 = sbr.rel (%p201) target = $region28
        $region27: #{tpu_custom_call.1} parent=11 // pred_region
          %205 = vsyncadd [#allocation9], 0
          %s206 = sshll.u32 %s4, 4
          %s207 = int_to_ptr.hbm [resolvable:$true] %s206
          %s208 = sshll.u32 [#allocation8], 4
          %s209 = int_to_ptr.vmem [resolvable:$true] %s208
          %214 = dma.hbm_to_vmem [thread:$0]  %s207, 32, %s209, [#allocation9], 16, 16, 1
        $region28: #{tpu_custom_call.1} parent=11 // pred_fallthru
          _
      $region12: #{tpu_custom_call.1} parent=5 // pred_fallthru
        _
      %p215 = scmp.lt.s32.totalorder %s19, 2
      // Predicated region
      $region29: #{tpu_custom_call.1} parent=5 // pred_check
        %p216 = pneg %p215
      $region30: #{tpu_custom_call.1} parent=5 // pred_check_branch
        %218 = sbr.rel (%p216) target = $region32
      $region31: #{tpu_custom_call.1} parent=5 // pred_region
        // Predicated region
        $region33: #{tpu_custom_call.1} parent=31 // pred_check
          %p219 = pneg %p39
        $region34: #{tpu_custom_call.1} parent=31 // pred_check_branch
          %221 = sbr.rel (%p219) target = $region36
        $region35: #{tpu_custom_call.1} parent=31 // pred_region
          %s222 = sand.u32 %s29, 1
          %s223 = scalar_lea.sflag [#allocation3], %s222
          %s224 = sand.u32 %s29, 1
          %s225 = smul.addr %s224, 16
          %s226 = scalar_lea.vmem [#allocation2], %s225
          %s227 = smul.u32 4, %s19
          %229 = vsyncadd %s223, 0
          %s230 = smul.addr %s227, 4
          %s231 = scalar_lea.hbm %s0, %s230
          %s232 = sshll.u32 %s231, 4
          %s233 = int_to_ptr.hbm [resolvable:$true] %s232
          %s234 = sshll.u32 %s226, 4
          %s235 = int_to_ptr.vmem [resolvable:$true] %s234
          %240 = dma.hbm_to_vmem [thread:$0]  %s233, 256, %s235, %s223, 64, 64, 4
        $region36: #{tpu_custom_call.1} parent=31 // pred_fallthru
          _
      $region32: #{tpu_custom_call.1} parent=5 // pred_fallthru
        _
      %p241 = scmp.le.s32.totalorder 1, %s19
      %p242 = scmp.lt.s32.totalorder %s19, 3
      %p243 = pnand %p241, %p242
      %p244 = pneg %p243
      // Predicated region
      $region37: #{tpu_custom_call.1} parent=5 // pred_check
        _
      $region38: #{tpu_custom_call.1} parent=5 // pred_check_branch
        %246 = sbr.rel (%p243) target = $region40
      $region39: #{tpu_custom_call.1} parent=5 // pred_region
        %s247 = ssub.s32 %s19, 1
        %s248 = sand.u32 %s32, 1
        %s249 = scalar_lea.sflag [#allocation3], %s248
        %s250 = sand.u32 %s32, 1
        %s251 = smul.addr %s250, 16
        %s252 = scalar_lea.vmem [#allocation2], %s251
        // Predicated region
        $region41: #{tpu_custom_call.1} parent=39 // pred_check
          %p253 = pneg %p45
        $region42: #{tpu_custom_call.1} parent=39 // pred_check_branch
          %255 = sbr.rel (%p253) target = $region44
        $region43: #{tpu_custom_call.1} parent=39 // pred_region
          %257 = dma.done %s249, 256
        $region44: #{tpu_custom_call.1} parent=39 // pred_fallthru
          _
        // Predicated region
        $region45: #{tpu_custom_call.1} parent=39 // pred_check
          %p258 = pneg %p66
        $region46: #{tpu_custom_call.1} parent=39 // pred_check_branch
          %260 = sbr.rel (%p258) target = $region48
        $region47: #{tpu_custom_call.1} parent=39 // pred_region
          %262 = dma.done [#allocation6], 3072
        $region48: #{tpu_custom_call.1} parent=39 // pred_fallthru
          _
        // Predicated region
        $region49: #{tpu_custom_call.1} parent=39 // pred_check
          %p263 = pneg %p87
        $region50: #{tpu_custom_call.1} parent=39 // pred_check_branch
          %265 = sbr.rel (%p263) target = $region52
        $region51: #{tpu_custom_call.1} parent=39 // pred_region
          %267 = dma.done [#allocation6], 48
        $region52: #{tpu_custom_call.1} parent=39 // pred_fallthru
          _
        // Predicated region
        $region53: #{tpu_custom_call.1} parent=39 // pred_check
          %p268 = pneg %p129
        $region54: #{tpu_custom_call.1} parent=39 // pred_check_branch
          %270 = sbr.rel (%p268) target = $region56
        $region55: #{tpu_custom_call.1} parent=39 // pred_region
          %272 = dma.done [#allocation9], 32
        $region56: #{tpu_custom_call.1} parent=39 // pred_fallthru
          _
        %s273 = sand.u32 %s32, 1
        %s274 = scalar_lea.sflag [#allocation3], %s273
        %s275 = sand.u32 %s32, 1
        %s276 = smul.addr %s275, 16
        %s277 = scalar_lea.vmem [#allocation2], %s276
        %p278 = pneg %p45
        %p279 = pneg %p42
        %p280 = pneg %p66
        %p281 = pneg %p63
        %p282 = pneg %p87
        %p283 = pneg %p84
        %p284 = pneg %p108
        %p285 = pneg %p105
        %p286 = pneg %p129
        %p287 = pneg %p126
        %p288 = pneg %p155
        %p289 = pneg %p152
        %s290 = sand.u32 %s142, 1
        %s291 = scalar_lea.sflag [#allocation4], %s290
        %s292 = sand.u32 %s142, 1
        %s293 = smul.addr %s292, 32
        %s294 = scalar_lea.vmem [#allocation10], %s293
        %s295 = smul.u32 4, %s24
        %s296 = smul.u32 4, %s24
        %v297 = vld [vmem:[%s252] sm:$0xf]
        %v298 = vld [vmem:[%s252 + $0x4] sm:$0xf]
        %v299 = vld [vmem:[%s252 + $0x8] sm:$0xf]
        %v300 = vld [vmem:[%s252 + $0xc] sm:$0xf]
        %v301 = vld [vmem:[#allocation5] sm:$0xf]
        %v302 = vld [vmem:[#allocation5 + $0x4] sm:$0xf]
        %v303 = vld [vmem:[#allocation5 + $0x8] sm:$0xf]
        %v304 = vld [vmem:[#allocation5 + $0xc] sm:$0xf]
        %v305 = vld [vmem:[#allocation5 + $0x10] sm:$0xf]
        %v306 = vld [vmem:[#allocation5 + $0x14] sm:$0xf]
        %v307 = vld [vmem:[#allocation5 + $0x18] sm:$0xf]
        %v308 = vld [vmem:[#allocation5 + $0x1c] sm:$0xf]
        %v309 = vld [vmem:[#allocation5 + $0x20] sm:$0xf]
        %v310 = vld [vmem:[#allocation5 + $0x24] sm:$0xf]
        %v311 = vld [vmem:[#allocation5 + $0x28] sm:$0xf]
        %v312 = vld [vmem:[#allocation5 + $0x2c] sm:$0xf]
        %v313 = vld [vmem:[#allocation5 + $0x30] sm:$0xf]
        %v314 = vld [vmem:[#allocation5 + $0x34] sm:$0xf]
        %v315 = vld [vmem:[#allocation5 + $0x38] sm:$0xf]
        %v316 = vld [vmem:[#allocation5 + $0x3c] sm:$0xf]
        %v317 = vld [vmem:[#allocation7] sm:$0x1]
        %v319 = vperm.slane %v317, 0
        %v325 = vunpack.c.l.b16 %v297
        %v326 = vunpack.c.l.b16 %v298
        %v327 = vunpack.c.l.b16 %v299
        %v328 = vunpack.c.l.b16 %v300
        %v329 = vpack.c.b16 %v326, %v325
        %v330 = vpack.c.b16 %v328, %v327
        %v349 = vunpack.c.l.b16 %v301
        %v350 = vunpack.c.l.b16 %v302
        %v351 = vunpack.c.l.b16 %v303
        %v352 = vunpack.c.l.b16 %v304
        %v353 = vunpack.c.l.b16 %v305
        %v354 = vunpack.c.l.b16 %v306
        %v355 = vunpack.c.l.b16 %v307
        %v356 = vunpack.c.l.b16 %v308
        %v357 = vunpack.c.l.b16 %v309
        %v358 = vunpack.c.l.b16 %v310
        %v359 = vunpack.c.l.b16 %v311
        %v360 = vunpack.c.l.b16 %v312
        %v361 = vunpack.c.l.b16 %v313
        %v362 = vunpack.c.l.b16 %v314
        %v363 = vunpack.c.l.b16 %v315
        %v364 = vunpack.c.l.b16 %v316
        %v365 = vpack.c.b16 %v350, %v349
        %v366 = vpack.c.b16 %v352, %v351
        %v367 = vpack.c.b16 %v354, %v353
        %v368 = vpack.c.b16 %v356, %v355
        %v369 = vpack.c.b16 %v358, %v357
        %v370 = vpack.c.b16 %v360, %v359
        %v371 = vpack.c.b16 %v362, %v361
        %v372 = vpack.c.b16 %v364, %v363
        %381 = vmatpush.bf16.msra.mxu0 %v372
        %382 = vmatpush.bf16.msra.mxu0 %v371
        %383 = vmatpush.bf16.msra.mxu0 %v370
        %384 = vmatpush.bf16.msra.mxu0 %v369
        %385 = vmatpush.bf16.msra.mxu0 %v368
        %386 = vmatpush.bf16.msra.mxu0 %v367
        %387 = vmatpush.bf16.msra.mxu0 %v366
        %388 = vmatpush.bf16.msra.mxu0 %v365
        %389 = vmatmul.bf16.gmra.mxu0 %v329
        %v390 = vpop.f32.mrf.mxu0
        %v391 = vadd.f32 %v319, %v390
        %v392 = vpop.f32.mrf.mxu0
        %v393 = vadd.f32 %v319, %v392
        %394 = vmatmul.bf16.gmra.mxu0 %v330
        %v395 = vpop.f32.mrf.mxu0
        %v396 = vadd.f32 %v319, %v395
        %v397 = vpop.f32.mrf.mxu0
        %v398 = vadd.f32 %v319, %v397
        %399 = vdwg.mxu0
        %400 = vadd.xlane.f32.xlu0 %v391
        %v401 = vpop.xlane.xlu0 %400
        %402 = vadd.xlane.f32.xlu0 %v393
        %v403 = vpop.xlane.xlu0 %402
        %404 = vadd.xlane.f32.xlu0 %v396
        %v405 = vpop.xlane.xlu0 %404
        %406 = vadd.xlane.f32.xlu0 %v398
        %v407 = vpop.xlane.xlu0 %406
        %v408 = vrcp.pop 128.0
        %v409 = vmul.f32 128.0, %v408
        %v410 = vsub.f32 1.0, %v409
        %v411 = vmul.f32 %v408, %v410
        %v412 = vadd.f32 %v408, %v411
        %vm413 = vweird.f32 %v408
        %v414 = vsel %vm413, %v408, %v412
        %v415 = vmul.f32 %v401, %v414
        %v416 = vmul.f32 %v403, %v414
        %v417 = vmul.f32 %v405, %v414
        %v418 = vmul.f32 %v407, %v414
        %v419 = vsub.f32 %v391, %v415
        %v420 = vsub.f32 %v393, %v416
        %v421 = vsub.f32 %v396, %v417
        %v422 = vsub.f32 %v398, %v418
        %v423 = vmul.f32 %v419, %v419
        %v424 = vmul.f32 %v420, %v420
        %v425 = vmul.f32 %v421, %v421
        %v426 = vmul.f32 %v422, %v422
        %427 = vadd.xlane.f32.xlu0 %v423
        %v428 = vpop.xlane.xlu0 %427
        %429 = vadd.xlane.f32.xlu0 %v424
        %v430 = vpop.xlane.xlu0 %429
        %431 = vadd.xlane.f32.xlu0 %v425
        %v432 = vpop.xlane.xlu0 %431
        %433 = vadd.xlane.f32.xlu0 %v426
        %v434 = vpop.xlane.xlu0 %433
        %v435 = vmul.f32 %v428, %v414
        %v436 = vmul.f32 %v430, %v414
        %v437 = vmul.f32 %v432, %v414
        %v438 = vmul.f32 %v434, %v414
        %v439 = vadd.f32 %v435, 1e-12
        %v440 = vadd.f32 %v436, 1e-12
        %v441 = vadd.f32 %v437, 1e-12
        %v442 = vadd.f32 %v438, 1e-12
        %v443 = vrsqrt.pop %v439
        %v444 = vmul.f32 %v443, %v439
        %v445 = vmul.f32 %v444, %v443
        %v446 = vmul.f32 0.5, %v445
        %v447 = vsub.f32 1.5, %v446
        %v448 = vmul.f32 %v443, %v447
        %vm449 = vweird.f32 %v439
        %vm450 = vweird.f32 %v443
        %vm451 = vmor %vm449, %vm450
        %v452 = vsel %vm451, %v443, %v448
        %v453 = vrsqrt.pop %v440
        %v454 = vmul.f32 %v453, %v440
        %v455 = vmul.f32 %v454, %v453
        %v456 = vmul.f32 0.5, %v455
        %v457 = vsub.f32 1.5, %v456
        %v458 = vmul.f32 %v453, %v457
        %vm459 = vweird.f32 %v440
        %vm460 = vweird.f32 %v453
        %vm461 = vmor %vm459, %vm460
        %v462 = vsel %vm461, %v453, %v458
        %v463 = vrsqrt.pop %v441
        %v464 = vmul.f32 %v463, %v441
        %v465 = vmul.f32 %v464, %v463
        %v466 = vmul.f32 0.5, %v465
        %v467 = vsub.f32 1.5, %v466
        %v468 = vmul.f32 %v463, %v467
        %vm469 = vweird.f32 %v441
        %vm470 = vweird.f32 %v463
        %vm471 = vmor %vm469, %vm470
        %v472 = vsel %vm471, %v463, %v468
        %v473 = vrsqrt.pop %v442
        %v474 = vmul.f32 %v473, %v442
        %v475 = vmul.f32 %v474, %v473
        %v476 = vmul.f32 0.5, %v475
        %v477 = vsub.f32 1.5, %v476
        %v478 = vmul.f32 %v473, %v477
        %vm479 = vweird.f32 %v442
        %vm480 = vweird.f32 %v473
        %vm481 = vmor %vm479, %vm480
        %v482 = vsel %vm481, %v473, %v478
        %v483 = vmul.f32 %v419, %v452
        %v484 = vmul.f32 %v420, %v462
        %v485 = vmul.f32 %v421, %v472
        %v486 = vmul.f32 %v422, %v482
        %v487 = vld [vmem:[%s3] sm:$0x1]
        %v489 = vperm.slane %v487, 0
        %v491 = vmul.f32 %v483, %v489
        %v492 = vmul.f32 %v484, %v489
        %v493 = vmul.f32 %v485, %v489
        %v494 = vmul.f32 %v486, %v489
        %v495 = vld [vmem:[#allocation8] sm:$0x1]
        %v497 = vperm.slane %v495, 0
        %v499 = vadd.f32 %v491, %v497
        %v500 = vadd.f32 %v492, %v497
        %v501 = vadd.f32 %v493, %v497
        %v502 = vadd.f32 %v494, %v497
        %v503 = vmax.f32 %v499, 0.0
        %v504 = vmax.f32 %v500, 0.0
        %v505 = vmax.f32 %v501, 0.0
        %v506 = vmax.f32 %v502, 0.0
        %v507 = vpack.c.bf16 %v504, %v503
        %v508 = vpack.c.bf16 %v506, %v505
        %s509 = scalar_lea.vmem [#allocation5], 64
        %v510 = vld [vmem:[%s509] sm:$0xf]
        %v511 = vld [vmem:[%s509 + $0x4] sm:$0xf]
        %v512 = vld [vmem:[%s509 + $0x8] sm:$0xf]
        %v513 = vld [vmem:[%s509 + $0xc] sm:$0xf]
        %v514 = vld [vmem:[%s509 + $0x10] sm:$0xf]
        %v515 = vld [vmem:[%s509 + $0x14] sm:$0xf]
        %v516 = vld [vmem:[%s509 + $0x18] sm:$0xf]
        %v517 = vld [vmem:[%s509 + $0x1c] sm:$0xf]
        %v518 = vld [vmem:[%s509 + $0x20] sm:$0xf]
        %v519 = vld [vmem:[%s509 + $0x24] sm:$0xf]
        %v520 = vld [vmem:[%s509 + $0x28] sm:$0xf]
        %v521 = vld [vmem:[%s509 + $0x2c] sm:$0xf]
        %v522 = vld [vmem:[%s509 + $0x30] sm:$0xf]
        %v523 = vld [vmem:[%s509 + $0x34] sm:$0xf]
        %v524 = vld [vmem:[%s509 + $0x38] sm:$0xf]
        %v525 = vld [vmem:[%s509 + $0x3c] sm:$0xf]
        %s526 = scalar_lea.vmem [#allocation7], 1
        %v527 = vld [vmem:[%s526] sm:$0x1]
        %v529 = vperm.slane %v527, 0
        %v547 = vunpack.c.l.b16 %v510
        %v548 = vunpack.c.l.b16 %v511
        %v549 = vunpack.c.l.b16 %v512
        %v550 = vunpack.c.l.b16 %v513
        %v551 = vunpack.c.l.b16 %v514
        %v552 = vunpack.c.l.b16 %v515
        %v553 = vunpack.c.l.b16 %v516
        %v554 = vunpack.c.l.b16 %v517
        %v555 = vunpack.c.l.b16 %v518
        %v556 = vunpack.c.l.b16 %v519
        %v557 = vunpack.c.l.b16 %v520
        %v558 = vunpack.c.l.b16 %v521
        %v559 = vunpack.c.l.b16 %v522
        %v560 = vunpack.c.l.b16 %v523
        %v561 = vunpack.c.l.b16 %v524
        %v562 = vunpack.c.l.b16 %v525
        %v563 = vpack.c.b16 %v548, %v547
        %v564 = vpack.c.b16 %v550, %v549
        %v565 = vpack.c.b16 %v552, %v551
        %v566 = vpack.c.b16 %v554, %v553
        %v567 = vpack.c.b16 %v556, %v555
        %v568 = vpack.c.b16 %v558, %v557
        %v569 = vpack.c.b16 %v560, %v559
        %v570 = vpack.c.b16 %v562, %v561
        %579 = vmatpush.bf16.msra.mxu0 %v570
        %580 = vmatpush.bf16.msra.mxu0 %v569
        %581 = vmatpush.bf16.msra.mxu0 %v568
        %582 = vmatpush.bf16.msra.mxu0 %v567
        %583 = vmatpush.bf16.msra.mxu0 %v566
        %584 = vmatpush.bf16.msra.mxu0 %v565
        %585 = vmatpush.bf16.msra.mxu0 %v564
        %586 = vmatpush.bf16.msra.mxu0 %v563
        %587 = vmatmul.bf16.gmra.mxu0 %v507
        %v588 = vpop.f32.mrf.mxu0
        %v589 = vadd.f32 %v529, %v588
        %v590 = vpop.f32.mrf.mxu0
        %v591 = vadd.f32 %v529, %v590
        %592 = vmatmul.bf16.gmra.mxu0 %v508
        %v593 = vpop.f32.mrf.mxu0
        %v594 = vadd.f32 %v529, %v593
        %v595 = vpop.f32.mrf.mxu0
        %v596 = vadd.f32 %v529, %v595
        %597 = vdwg.mxu0
        %598 = vadd.xlane.f32.xlu0 %v589
        %v599 = vpop.xlane.xlu0 %598
        %600 = vadd.xlane.f32.xlu0 %v591
        %v601 = vpop.xlane.xlu0 %600
        %602 = vadd.xlane.f32.xlu0 %v594
        %v603 = vpop.xlane.xlu0 %602
        %604 = vadd.xlane.f32.xlu0 %v596
        %v605 = vpop.xlane.xlu0 %604
        %v606 = vmul.f32 %v599, %v414
        %v607 = vmul.f32 %v601, %v414
        %v608 = vmul.f32 %v603, %v414
        %v609 = vmul.f32 %v605, %v414
        %v610 = vsub.f32 %v589, %v606
        %v611 = vsub.f32 %v591, %v607
        %v612 = vsub.f32 %v594, %v608
        %v613 = vsub.f32 %v596, %v609
        %v614 = vmul.f32 %v610, %v610
        %v615 = vmul.f32 %v611, %v611
        %v616 = vmul.f32 %v612, %v612
        %v617 = vmul.f32 %v613, %v613
        %618 = vadd.xlane.f32.xlu0 %v614
        %v619 = vpop.xlane.xlu0 %618
        %620 = vadd.xlane.f32.xlu0 %v615
        %v621 = vpop.xlane.xlu0 %620
        %622 = vadd.xlane.f32.xlu0 %v616
        %v623 = vpop.xlane.xlu0 %622
        %624 = vadd.xlane.f32.xlu0 %v617
        %v625 = vpop.xlane.xlu0 %624
        %v626 = vmul.f32 %v619, %v414
        %v627 = vmul.f32 %v621, %v414
        %v628 = vmul.f32 %v623, %v414
        %v629 = vmul.f32 %v625, %v414
        %v630 = vadd.f32 %v626, 1e-12
        %v631 = vadd.f32 %v627, 1e-12
        %v632 = vadd.f32 %v628, 1e-12
        %v633 = vadd.f32 %v629, 1e-12
        %v634 = vrsqrt.pop %v630
        %v635 = vmul.f32 %v634, %v630
        %v636 = vmul.f32 %v635, %v634
        %v637 = vmul.f32 0.5, %v636
        %v638 = vsub.f32 1.5, %v637
        %v639 = vmul.f32 %v634, %v638
        %vm640 = vweird.f32 %v630
        %vm641 = vweird.f32 %v634
        %vm642 = vmor %vm640, %vm641
        %v643 = vsel %vm642, %v634, %v639
        %v644 = vrsqrt.pop %v631
        %v645 = vmul.f32 %v644, %v631
        %v646 = vmul.f32 %v645, %v644
        %v647 = vmul.f32 0.5, %v646
        %v648 = vsub.f32 1.5, %v647
        %v649 = vmul.f32 %v644, %v648
        %vm650 = vweird.f32 %v631
        %vm651 = vweird.f32 %v644
        %vm652 = vmor %vm650, %vm651
        %v653 = vsel %vm652, %v644, %v649
        %v654 = vrsqrt.pop %v632
        %v655 = vmul.f32 %v654, %v632
        %v656 = vmul.f32 %v655, %v654
        %v657 = vmul.f32 0.5, %v656
        %v658 = vsub.f32 1.5, %v657
        %v659 = vmul.f32 %v654, %v658
        %vm660 = vweird.f32 %v632
        %vm661 = vweird.f32 %v654
        %vm662 = vmor %vm660, %vm661
        %v663 = vsel %vm662, %v654, %v659
        %v664 = vrsqrt.pop %v633
        %v665 = vmul.f32 %v664, %v633
        %v666 = vmul.f32 %v665, %v664
        %v667 = vmul.f32 0.5, %v666
        %v668 = vsub.f32 1.5, %v667
        %v669 = vmul.f32 %v664, %v668
        %vm670 = vweird.f32 %v633
        %vm671 = vweird.f32 %v664
        %vm672 = vmor %vm670, %vm671
        %v673 = vsel %vm672, %v664, %v669
        %v674 = vmul.f32 %v610, %v643
        %v675 = vmul.f32 %v611, %v653
        %v676 = vmul.f32 %v612, %v663
        %v677 = vmul.f32 %v613, %v673
        %s678 = scalar_lea.vmem %s3, 1
        %v679 = vld [vmem:[%s678] sm:$0x1]
        %v681 = vperm.slane %v679, 0
        %v683 = vmul.f32 %v674, %v681
        %v684 = vmul.f32 %v675, %v681
        %v685 = vmul.f32 %v676, %v681
        %v686 = vmul.f32 %v677, %v681
        %s687 = scalar_lea.vmem [#allocation8], 1
        %v688 = vld [vmem:[%s687] sm:$0x1]
        %v690 = vperm.slane %v688, 0
        %v692 = vadd.f32 %v683, %v690
        %v693 = vadd.f32 %v684, %v690
        %v694 = vadd.f32 %v685, %v690
        %v695 = vadd.f32 %v686, %v690
        %v696 = vmax.f32 %v692, 0.0
        %v697 = vmax.f32 %v693, 0.0
        %v698 = vmax.f32 %v694, 0.0
        %v699 = vmax.f32 %v695, 0.0
        %v700 = vpack.c.bf16 %v697, %v696
        %v701 = vpack.c.bf16 %v699, %v698
        %s702 = scalar_lea.vmem [#allocation5], 128
        %v703 = vld [vmem:[%s702] sm:$0xf]
        %v704 = vld [vmem:[%s702 + $0x4] sm:$0xf]
        %v705 = vld [vmem:[%s702 + $0x8] sm:$0xf]
        %v706 = vld [vmem:[%s702 + $0xc] sm:$0xf]
        %v707 = vld [vmem:[%s702 + $0x10] sm:$0xf]
        %v708 = vld [vmem:[%s702 + $0x14] sm:$0xf]
        %v709 = vld [vmem:[%s702 + $0x18] sm:$0xf]
        %v710 = vld [vmem:[%s702 + $0x1c] sm:$0xf]
        %v711 = vld [vmem:[%s702 + $0x20] sm:$0xf]
        %v712 = vld [vmem:[%s702 + $0x24] sm:$0xf]
        %v713 = vld [vmem:[%s702 + $0x28] sm:$0xf]
        %v714 = vld [vmem:[%s702 + $0x2c] sm:$0xf]
        %v715 = vld [vmem:[%s702 + $0x30] sm:$0xf]
        %v716 = vld [vmem:[%s702 + $0x34] sm:$0xf]
        %v717 = vld [vmem:[%s702 + $0x38] sm:$0xf]
        %v718 = vld [vmem:[%s702 + $0x3c] sm:$0xf]
        %s719 = scalar_lea.vmem [#allocation7], 2
        %v720 = vld [vmem:[%s719] sm:$0x1]
        %v722 = vperm.slane %v720, 0
        %v740 = vunpack.c.l.b16 %v703
        %v741 = vunpack.c.l.b16 %v704
        %v742 = vunpack.c.l.b16 %v705
        %v743 = vunpack.c.l.b16 %v706
        %v744 = vunpack.c.l.b16 %v707
        %v745 = vunpack.c.l.b16 %v708
        %v746 = vunpack.c.l.b16 %v709
        %v747 = vunpack.c.l.b16 %v710
        %v748 = vunpack.c.l.b16 %v711
        %v749 = vunpack.c.l.b16 %v712
        %v750 = vunpack.c.l.b16 %v713
        %v751 = vunpack.c.l.b16 %v714
        %v752 = vunpack.c.l.b16 %v715
        %v753 = vunpack.c.l.b16 %v716
        %v754 = vunpack.c.l.b16 %v717
        %v755 = vunpack.c.l.b16 %v718
        %v756 = vpack.c.b16 %v741, %v740
        %v757 = vpack.c.b16 %v743, %v742
        %v758 = vpack.c.b16 %v745, %v744
        %v759 = vpack.c.b16 %v747, %v746
        %v760 = vpack.c.b16 %v749, %v748
        %v761 = vpack.c.b16 %v751, %v750
        %v762 = vpack.c.b16 %v753, %v752
        %v763 = vpack.c.b16 %v755, %v754
        %772 = vmatpush.bf16.msra.mxu0 %v763
        %773 = vmatpush.bf16.msra.mxu0 %v762
        %774 = vmatpush.bf16.msra.mxu0 %v761
        %775 = vmatpush.bf16.msra.mxu0 %v760
        %776 = vmatpush.bf16.msra.mxu0 %v759
        %777 = vmatpush.bf16.msra.mxu0 %v758
        %778 = vmatpush.bf16.msra.mxu0 %v757
        %779 = vmatpush.bf16.msra.mxu0 %v756
        %780 = vmatmul.bf16.gmra.mxu0 %v700
        %v781 = vpop.f32.mrf.mxu0
        %v782 = vadd.f32 %v722, %v781
        %v783 = vpop.f32.mrf.mxu0
        %v784 = vadd.f32 %v722, %v783
        %785 = vmatmul.bf16.gmra.mxu0 %v701
        %v786 = vpop.f32.mrf.mxu0
        %v787 = vadd.f32 %v722, %v786
        %v788 = vpop.f32.mrf.mxu0
        %v789 = vadd.f32 %v722, %v788
        %790 = vdwg.mxu0
        %791 = vst [vmem:[%s294] sm:$0xff] %v782
        %792 = vst [vmem:[%s294 + $0x8] sm:$0xff] %v784
        %793 = vst [vmem:[%s294 + $0x10] sm:$0xff] %v787
        %794 = vst [vmem:[%s294 + $0x18] sm:$0xff] %v789
        %s795 = sand.u32 %s142, 1
        %s796 = scalar_lea.sflag [#allocation4], %s795
        %s797 = sand.u32 %s142, 1
        %s798 = smul.addr %s797, 32
        %s799 = scalar_lea.vmem [#allocation10], %s798
        // Predicated region
        $region57: #{tpu_custom_call.1} parent=39 // pred_check
          %p800 = pneg %p152
        $region58: #{tpu_custom_call.1} parent=39 // pred_check_branch
          %802 = sbr.rel (%p800) target = $region60
        $region59: #{tpu_custom_call.1} parent=39 // pred_region
          %s803 = smul.u32 4, %s24
          %805 = vsyncadd %s796, 0
          %s806 = smul.addr %s803, 8
          %s807 = scalar_lea.hbm %s5, %s806
          %s808 = sshll.u32 %s799, 4
          %s809 = int_to_ptr.vmem [resolvable:$true] %s808
          %s810 = sshll.u32 %s807, 4
          %s811 = int_to_ptr.hbm [resolvable:$true] %s810
          %816 = dma.vmem_to_hbm [thread:$0]  %s809, 512, %s811, %s796, 128, 128, 8
        $region60: #{tpu_custom_call.1} parent=39 // pred_fallthru
          _
      $region40: #{tpu_custom_call.1} parent=5 // pred_fallthru
        _
      %p817 = scmp.le.s32.totalorder 2, %s19
      // Predicated region
      $region61: #{tpu_custom_call.1} parent=5 // pred_check
        %p818 = pneg %p817
      $region62: #{tpu_custom_call.1} parent=5 // pred_check_branch
        %820 = sbr.rel (%p818) target = $region64
      $region63: #{tpu_custom_call.1} parent=5 // pred_region
        %s821 = ssub.s32 %s19, 2
        // Predicated region
        $region65: #{tpu_custom_call.1} parent=63 // pred_check
          %p822 = pneg %p158
        $region66: #{tpu_custom_call.1} parent=63 // pred_check_branch
          %824 = sbr.rel (%p822) target = $region68
        $region67: #{tpu_custom_call.1} parent=63 // pred_region
          %s825 = sand.u32 %s143, 1
          %s826 = scalar_lea.sflag [#allocation4], %s825
          %s827 = sand.u32 %s143, 1
          %s828 = smul.addr %s827, 32
          %s829 = scalar_lea.vmem [#allocation10], %s828
          %831 = dma.done %s826, 512
        $region68: #{tpu_custom_call.1} parent=63 // pred_fallthru
          _
      $region64: #{tpu_custom_call.1} parent=5 // pred_fallthru
        _
    $region6: #{tpu_custom_call.1} parent=1 // loop_footer
      %s23 = sadd.s32 1, %s19
    $region7: #{tpu_custom_call.1} parent=1 // loop_footer_branch
      %18 = sbr.rel target = $region3
    $region8: #{tpu_custom_call.1} parent=1 // loop_exit
      _
    %832 = vsyncpa [#allocation3], 1
    %s833 = scalar_lea.sflag [#allocation3], 1
    %834 = vsyncpa %s833, 1
    %835 = vsyncpa [#allocation6], 1
    %836 = vsyncpa [#allocation9], 1
    %837 = vsyncpa [#allocation4], 1
    %s838 = scalar_lea.sflag [#allocation4], 1
    %839 = vsyncpa %s838, 1

</llo_original>
